<compile_context>
chip_gen: v7x
topology: tpu7x:2x2x1
jax: 0.10.0
libtpu: 0.0.40
codegen_flags: <defaults>
</compile_context>

<pallas_src>
import functools

import jax
import jax.numpy as jnp
from jax import lax
from jax.experimental import pallas as pl
from jax.experimental.pallas import tpu as pltpu


def _l2norm(t):
    nrm = jnp.sqrt(jnp.sum(t * t, axis=-1, keepdims=True))
    return t / jnp.maximum(nrm, 1e-12)


def _attention_kernel(x_ref, gn_ref, wq_ref, wk_ref, wv_ref, nk_ref, nv_ref,
                      qs_ref, ks_ref, wo_ref, go_ref, o_ref, *,
                      b_tile, n, dim, heads, dim_head, eps):
    f32 = jnp.float32
    rows = b_tile * n

    x = x_ref[...].astype(f32)                                    # (rows, dim)

    # ---- LayerNorm(dim): (x - mean) * rsqrt(var + eps) * g (two-pass var) --
    mean = jnp.mean(x, axis=-1, keepdims=True)
    xc = x - mean
    var = jnp.mean(xc * xc, axis=-1, keepdims=True)
    xn = xc * lax.rsqrt(var + eps) * gn_ref[...]                   # (rows, dim)

    # ---- k / v projections on the whole slab --------------------------------
    ks = ks_ref[...]                                               # (1, dh)
    k = _l2norm(jnp.dot(xn, wk_ref[...], preferred_element_type=f32)) * ks
    v = jnp.dot(xn, wv_ref[...], preferred_element_type=f32)       # (rows, dh)

    # ---- per-head q projections (weights pre-split -> no lane slicing) ------
    qs = qs_ref[...]                                               # q_scale*scale
    q_heads = [
        _l2norm(jnp.dot(xn, wq_ref[h], preferred_element_type=f32)) * qs
        for h in range(heads)
    ]                                                              # each (rows, dh)

    nk = nk_ref[...]                                               # l2norm(null_k)*k_scale
    nv = nv_ref[...]                                               # null_v

    # ---- per-batch attention core (heads stacked along sublanes) ------------
    out_chunks = [[] for _ in range(heads)]
    for bi in range(b_tile):
        lo = bi * n
        kb = k[lo:lo + n, :]                                       # (n, dh)
        vb = v[lo:lo + n, :]                                       # (n, dh)
        q2 = jnp.concatenate([qh[lo:lo + n, :] for qh in q_heads],
                             axis=0)                               # (heads*n, dh)

        sim = lax.dot_general(q2, kb, (((1,), (1,)), ((), ())),
                              preferred_element_type=f32)          # (heads*n, n)
        # null k/v handled as an online-softmax rank-1 correction.
        sim_null = jnp.sum(q2 * nk, axis=-1, keepdims=True)        # (heads*n, 1)

        m = jnp.maximum(jnp.max(sim, axis=-1, keepdims=True), sim_null)
        p = jnp.exp(sim - m)
        p_null = jnp.exp(sim_null - m)
        inv = pl.reciprocal(jnp.sum(p, axis=-1, keepdims=True) + p_null,
                            approx=False)
        o2 = (jnp.dot(p, vb, preferred_element_type=f32)
              + p_null * nv) * inv                                 # (heads*n, dh)

        for h in range(heads):
            out_chunks[h].append(o2[h * n:(h + 1) * n, :])

    # ---- output projection: per-head matmul accumulated on the slab ---------
    y = jnp.zeros((rows, dim), f32)
    for h in range(heads):
        oh = (out_chunks[h][0] if b_tile == 1
              else jnp.concatenate(out_chunks[h], axis=0))         # (rows, dh)
        y = y + jnp.dot(oh, wo_ref[h], preferred_element_type=f32)

    # ---- final LayerNorm -----------------------------------------------------
    m2 = jnp.mean(y, axis=-1, keepdims=True)
    yc = y - m2
    v2 = jnp.mean(yc * yc, axis=-1, keepdims=True)
    y = yc * lax.rsqrt(v2 + eps) * go_ref[...]

    o_ref[...] = y.astype(o_ref.dtype)


def pallas_attention(x, g_norm, wq, wkv, null_kv, q_scale, k_scale, wo, g_out,
                     *, heads, scale=8.0):
    """Attention forward (default None path of the PyTorch module).

    x:        (b, n, dim)
    g_norm:   (dim,)                  pre-norm LayerNorm gain
    wq:       (heads*dim_head, dim)   to_q.weight (PyTorch (out, in) layout)
    wkv:      (2*dim_head, dim)       to_kv.weight
    null_kv:  (2, dim_head)
    q_scale:  (dim_head,)
    k_scale:  (dim_head,)
    wo:       (dim, heads*dim_head)   to_out[0].weight
    g_out:    (dim,)                  post-projection LayerNorm gain
    returns   (b, n, dim) in x.dtype
    """
    b, n, dim = x.shape
    hidden = wq.shape[0]
    dim_head = hidden // heads
    assert hidden == heads * dim_head
    assert wkv.shape[0] == 2 * dim_head

    f32 = jnp.float32
    eps = 1e-5 if x.dtype == jnp.float32 else 1e-3

    # Weight prep (tiny constants, folded by XLA). PyTorch Linear weights are
    # (out, in); pre-split per head so the kernel never slices the lane axis.
    wq3 = jnp.transpose(wq.reshape(heads, dim_head, dim), (0, 2, 1)).astype(f32)
    wk_t = jnp.transpose(wkv[:dim_head]).astype(f32)               # (dim, dh)
    wv_t = jnp.transpose(wkv[dim_head:]).astype(f32)               # (dim, dh)
    wo3 = jnp.transpose(wo.reshape(dim, heads, dim_head), (1, 2, 0)).astype(f32)
    gn = g_norm.reshape(1, dim).astype(f32)
    go = g_out.reshape(1, dim).astype(f32)
    qs = (q_scale.astype(f32) * f32(scale)).reshape(1, dim_head)   # fold scale
    ks = k_scale.reshape(1, dim_head).astype(f32)
    nk0 = null_kv[0].astype(f32)
    nk = (nk0 / jnp.maximum(jnp.sqrt(jnp.sum(nk0 * nk0)), 1e-12)
          * k_scale.astype(f32)).reshape(1, dim_head)
    nv = null_kv[1].reshape(1, dim_head).astype(f32)

    # Batch elements per grid step: collapse small problems into one step.
    target = max(1, 256 // max(n, 1))
    b_tile = 1
    for cand in range(1, b + 1):
        if b % cand == 0 and cand <= target:
            b_tile = cand
    rows_tile = b_tile * n
    grid = (b // b_tile,)

    # Soft VMEM footprint guard (v7x has 64 MiB total / 32 MiB default scoped).
    vmem_est = 4 * (3 * rows_tile * dim
                    + rows_tile * dim_head * (heads + 2)
                    + b_tile * heads * n * (n + 2 * dim_head)
                    + 2 * heads * dim * dim_head)
    assert vmem_est < 24 * 1024 * 1024, (
        "attention intermediates exceed the VMEM budget; add kv tiling")

    x2 = x.reshape(b * n, dim)     # free, row-major contiguous

    kernel = functools.partial(
        _attention_kernel, b_tile=b_tile, n=n, dim=dim, heads=heads,
        dim_head=dim_head, eps=float(eps))

    out = pl.pallas_call(
        kernel,
        out_shape=jax.ShapeDtypeStruct((b * n, dim), x.dtype),
        grid=grid,
        in_specs=[
            pl.BlockSpec((rows_tile, dim), lambda i: (i, 0)),            # x slab
            pl.BlockSpec((1, dim), lambda i: (0, 0)),                    # norm g
            pl.BlockSpec((heads, dim, dim_head), lambda i: (0, 0, 0)),   # Wq per head
            pl.BlockSpec((dim, dim_head), lambda i: (0, 0)),             # Wk^T
            pl.BlockSpec((dim, dim_head), lambda i: (0, 0)),             # Wv^T
            pl.BlockSpec((1, dim_head), lambda i: (0, 0)),               # null k (normed*ks)
            pl.BlockSpec((1, dim_head), lambda i: (0, 0)),               # null v
            pl.BlockSpec((1, dim_head), lambda i: (0, 0)),               # q_scale*scale
            pl.BlockSpec((1, dim_head), lambda i: (0, 0)),               # k_scale
            pl.BlockSpec((heads, dim_head, dim), lambda i: (0, 0, 0)),   # Wo per head
            pl.BlockSpec((1, dim), lambda i: (0, 0)),                    # out g
        ],
        out_specs=pl.BlockSpec((rows_tile, dim), lambda i: (i, 0)),
        compiler_params=pltpu.CompilerParams(
            dimension_semantics=("parallel",)),
    )(x2, gn, wq3, wk_t, wv_t, nk, nv, qs, ks, wo3, go)

    return out.reshape(b, n, dim)


# ---------------- pure-JAX reference (for correctness check) ----------------
def reference_attention(x, g_norm, wq, wkv, null_kv, q_scale, k_scale, wo,
                        g_out, *, heads, scale=8.0, eps=1e-5):
    b, n, dim = x.shape
    dim_head = wkv.shape[0] // 2
    hi = lax.Precision.HIGHEST

    def ln(t, g):
        m = t.mean(-1, keepdims=True)
        v = ((t - m) ** 2).mean(-1, keepdims=True)
        return (t - m) * lax.rsqrt(v + eps) * g

    def l2n(t):
        return t / jnp.maximum(
            jnp.sqrt(jnp.sum(t * t, axis=-1, keepdims=True)), 1e-12)

    xn = ln(x, g_norm)
    q = jnp.matmul(xn, wq.T, precision=hi)                  # (b, n, h*d)
    kv = jnp.matmul(xn, wkv.T, precision=hi)                # (b, n, 2*d)
    k, v = kv[..., :dim_head], kv[..., dim_head:]
    nk = jnp.broadcast_to(null_kv[0], (b, 1, dim_head))
    nv = jnp.broadcast_to(null_kv[1], (b, 1, dim_head))
    k = jnp.concatenate([nk, k], axis=1)                    # (b, n+1, d)
    v = jnp.concatenate([nv, v], axis=1)
    q = q.reshape(b, n, heads, dim_head).transpose(0, 2, 1, 3)  # (b, h, n, d)
    q = l2n(q) * q_scale
    k = l2n(k) * k_scale
    sim = jnp.einsum('bhid,bjd->bhij', q, k, precision=hi) * scale
    attn = jax.nn.softmax(sim.astype(jnp.float32), axis=-1)
    out = jnp.einsum('bhij,bjd->bhid', attn, v, precision=hi)
    out = out.transpose(0, 2, 1, 3).reshape(b, n, heads * dim_head)
    y = jnp.matmul(out, wo.T, precision=hi)
    return ln(y, g_out)


if __name__ == "__main__":
    key = jax.random.PRNGKey(0)
    ksplit = jax.random.split(key, 9)

    b, n, dim = 2, 16, 64
    heads, dim_head, scale = 4, 32, 8.0
    hidden = heads * dim_head

    x = jax.random.normal(ksplit[0], (b, n, dim), jnp.float32)
    g_norm = 1.0 + 0.1 * jax.random.normal(ksplit[1], (dim,), jnp.float32)
    wq = 0.1 * jax.random.normal(ksplit[2], (hidden, dim), jnp.float32)
    wkv = 0.1 * jax.random.normal(ksplit[3], (2 * dim_head, dim), jnp.float32)
    null_kv = jax.random.normal(ksplit[4], (2, dim_head), jnp.float32)
    q_scale = 1.0 + 0.1 * jax.random.normal(ksplit[5], (dim_head,), jnp.float32)
    k_scale = 1.0 + 0.1 * jax.random.normal(ksplit[6], (dim_head,), jnp.float32)
    wo = 0.1 * jax.random.normal(ksplit[7], (dim, hidden), jnp.float32)
    g_out = 1.0 + 0.1 * jax.random.normal(ksplit[8], (dim,), jnp.float32)

    out = pallas_attention(x, g_norm, wq, wkv, null_kv, q_scale, k_scale, wo,
                           g_out, heads=heads, scale=scale)
    jax.block_until_ready(out)

    ref = reference_attention(x, g_norm, wq, wkv, null_kv, q_scale, k_scale,
                              wo, g_out, heads=heads, scale=scale)
    assert out.shape == (b, n, dim)
    assert out.dtype == x.dtype
    assert jnp.allclose(out, ref, rtol=2e-3, atol=2e-3), (
        "mismatch: max abs err = %f" % float(jnp.max(jnp.abs(out - ref))))

    print("KERNEL_OK")
</pallas_src>

<mosaic_0001>
module attributes {stable_mosaic.version = 11 : i64} {
  func.func @_attention_kernel(%arg0: i32, %arg1: memref<32x64xf32, #tpu.memory_space<vmem>>, %arg2: memref<1x64xf32, #tpu.memory_space<vmem>>, %arg3: memref<4x64x32xf32, #tpu.memory_space<vmem>>, %arg4: memref<64x32xf32, #tpu.memory_space<vmem>>, %arg5: memref<64x32xf32, #tpu.memory_space<vmem>>, %arg6: memref<1x32xf32, #tpu.memory_space<vmem>>, %arg7: memref<1x32xf32, #tpu.memory_space<vmem>>, %arg8: memref<1x32xf32, #tpu.memory_space<vmem>>, %arg9: memref<1x32xf32, #tpu.memory_space<vmem>>, %arg10: memref<4x32x64xf32, #tpu.memory_space<vmem>>, %arg11: memref<1x64xf32, #tpu.memory_space<vmem>>, %arg12: memref<32x64xf32, #tpu.memory_space<vmem>>) attributes {dimension_semantics = [#tpu.dimension_semantics<parallel>], iteration_bounds = array<i64: 1>, scalar_prefetch = 0 : i64, scratch_operands = 0 : i64, tpu.core_type = #tpu.core_type<tc>, window_params = [{transform_indices = @transform_0, window_bounds = array<i64: 32, 64>}, {pipeline_mode = #tpu.pipeline_mode<synchronous>, transform_indices = @transform_1, window_bounds = array<i64: 1, 64>}, {pipeline_mode = #tpu.pipeline_mode<synchronous>, transform_indices = @transform_2, window_bounds = array<i64: 4, 64, 32>}, {pipeline_mode = #tpu.pipeline_mode<synchronous>, transform_indices = @transform_3, window_bounds = array<i64: 64, 32>}, {pipeline_mode = #tpu.pipeline_mode<synchronous>, transform_indices = @transform_4, window_bounds = array<i64: 64, 32>}, {pipeline_mode = #tpu.pipeline_mode<synchronous>, transform_indices = @transform_5, window_bounds = array<i64: 1, 32>}, {pipeline_mode = #tpu.pipeline_mode<synchronous>, transform_indices = @transform_6, window_bounds = array<i64: 1, 32>}, {pipeline_mode = #tpu.pipeline_mode<synchronous>, transform_indices = @transform_7, window_bounds = array<i64: 1, 32>}, {pipeline_mode = #tpu.pipeline_mode<synchronous>, transform_indices = @transform_8, window_bounds = array<i64: 1, 32>}, {pipeline_mode = #tpu.pipeline_mode<synchronous>, transform_indices = @transform_9, window_bounds = array<i64: 4, 32, 64>}, {pipeline_mode = #tpu.pipeline_mode<synchronous>, transform_indices = @transform_10, window_bounds = array<i64: 1, 64>}, {transform_indices = @transform_11, window_bounds = array<i64: 32, 64>}]} {
    %c0 = arith.constant 0 : index
    %c0_0 = arith.constant 0 : index
    %0 = vector.load %arg1[%c0, %c0_0] : memref<32x64xf32, #tpu.memory_space<vmem>>, vector<32x64xf32>
    %cst = arith.constant dense<0.000000e+00> : vector<32xf32>
    %1 = vector.multi_reduction <add>, %0, %cst [1] : vector<32x64xf32> to vector<32xf32>
    %2 = vector.shape_cast %1 : vector<32xf32> to vector<32x1xf32>
    %cst_1 = arith.constant 6.400000e+01 : f32
    %3 = vector.broadcast %cst_1 : f32 to vector<32x1xf32>
    %4 = arith.divf %2, %3 : vector<32x1xf32>
    %5 = vector.broadcast %4 : vector<32x1xf32> to vector<32x64xf32>
    %6 = arith.subf %0, %5 : vector<32x64xf32>
    %7 = arith.mulf %6, %6 : vector<32x64xf32>
    %cst_2 = arith.constant dense<0.000000e+00> : vector<32xf32>
    %8 = vector.multi_reduction <add>, %7, %cst_2 [1] : vector<32x64xf32> to vector<32xf32>
    %9 = vector.shape_cast %8 : vector<32xf32> to vector<32x1xf32>
    %cst_3 = arith.constant 6.400000e+01 : f32
    %10 = vector.broadcast %cst_3 : f32 to vector<32x1xf32>
    %11 = arith.divf %9, %10 : vector<32x1xf32>
    %cst_4 = arith.constant 9.99999974E-6 : f32
    %12 = vector.broadcast %cst_4 : f32 to vector<32x1xf32>
    %13 = arith.addf %11, %12 : vector<32x1xf32>
    %14 = math.rsqrt %13 : vector<32x1xf32>
    %15 = vector.broadcast %14 : vector<32x1xf32> to vector<32x64xf32>
    %16 = arith.mulf %6, %15 : vector<32x64xf32>
    %c0_5 = arith.constant 0 : index
    %c0_6 = arith.constant 0 : index
    %17 = vector.load %arg2[%c0_5, %c0_6] : memref<1x64xf32, #tpu.memory_space<vmem>>, vector<1x64xf32>
    %18 = vector.broadcast %17 : vector<1x64xf32> to vector<32x64xf32>
    %19 = arith.mulf %16, %18 : vector<32x64xf32>
    %c0_7 = arith.constant 0 : index
    %c0_8 = arith.constant 0 : index
    %20 = vector.load %arg9[%c0_7, %c0_8] : memref<1x32xf32, #tpu.memory_space<vmem>>, vector<1x32xf32>
    %c0_9 = arith.constant 0 : index
    %c0_10 = arith.constant 0 : index
    %21 = vector.load %arg4[%c0_9, %c0_10] : memref<64x32xf32, #tpu.memory_space<vmem>>, vector<64x32xf32>
    %cst_11 = arith.constant dense<0.000000e+00> : vector<32x32xf32>
    %22 = tpu.matmul %19, %21, %cst_11 {dimension_numbers = #tpu.dot_dimension_numbers<[1], [0], [0], [1], [0, 0, 1, 1], [], []>} : vector<32x64xf32>, vector<64x32xf32>, vector<32x32xf32> -> vector<32x32xf32>
    %23 = arith.mulf %22, %22 : vector<32x32xf32>
    %cst_12 = arith.constant dense<0.000000e+00> : vector<32xf32>
    %24 = vector.multi_reduction <add>, %23, %cst_12 [1] : vector<32x32xf32> to vector<32xf32>
    %25 = vector.shape_cast %24 : vector<32xf32> to vector<32x1xf32>
    %26 = math.sqrt %25 : vector<32x1xf32>
    %cst_13 = arith.constant 9.99999996E-13 : f32
    %27 = vector.broadcast %cst_13 : f32 to vector<32x1xf32>
    %28 = arith.maximumf %26, %27 : vector<32x1xf32>
    %29 = vector.broadcast %28 : vector<32x1xf32> to vector<32x32xf32>
    %30 = arith.divf %22, %29 : vector<32x32xf32>
    %31 = vector.broadcast %20 : vector<1x32xf32> to vector<32x32xf32>
    %32 = arith.mulf %30, %31 : vector<32x32xf32>
    %c0_14 = arith.constant 0 : index
    %c0_15 = arith.constant 0 : index
    %33 = vector.load %arg5[%c0_14, %c0_15] : memref<64x32xf32, #tpu.memory_space<vmem>>, vector<64x32xf32>
    %cst_16 = arith.constant dense<0.000000e+00> : vector<32x32xf32>
    %34 = tpu.matmul %19, %33, %cst_16 {dimension_numbers = #tpu.dot_dimension_numbers<[1], [0], [0], [1], [0, 0, 1, 1], [], []>} : vector<32x64xf32>, vector<64x32xf32>, vector<32x32xf32> -> vector<32x32xf32>
    %c0_17 = arith.constant 0 : index
    %c0_18 = arith.constant 0 : index
    %35 = vector.load %arg8[%c0_17, %c0_18] : memref<1x32xf32, #tpu.memory_space<vmem>>, vector<1x32xf32>
    %c0_19 = arith.constant 0 : index
    %c0_20 = arith.constant 0 : index
    %c0_21 = arith.constant 0 : index
    %36 = vector.load %arg3[%c0_19, %c0_20, %c0_21] : memref<4x64x32xf32, #tpu.memory_space<vmem>>, vector<1x64x32xf32>
    %37 = vector.shape_cast %36 : vector<1x64x32xf32> to vector<64x32xf32>
    %cst_22 = arith.constant dense<0.000000e+00> : vector<32x32xf32>
    %38 = tpu.matmul %19, %37, %cst_22 {dimension_numbers = #tpu.dot_dimension_numbers<[1], [0], [0], [1], [0, 0, 1, 1], [], []>} : vector<32x64xf32>, vector<64x32xf32>, vector<32x32xf32> -> vector<32x32xf32>
    %39 = arith.mulf %38, %38 : vector<32x32xf32>
    %cst_23 = arith.constant dense<0.000000e+00> : vector<32xf32>
    %40 = vector.multi_reduction <add>, %39, %cst_23 [1] : vector<32x32xf32> to vector<32xf32>
    %41 = vector.shape_cast %40 : vector<32xf32> to vector<32x1xf32>
    %42 = math.sqrt %41 : vector<32x1xf32>
    %cst_24 = arith.constant 9.99999996E-13 : f32
    %43 = vector.broadcast %cst_24 : f32 to vector<32x1xf32>
    %44 = arith.maximumf %42, %43 : vector<32x1xf32>
    %45 = vector.broadcast %44 : vector<32x1xf32> to vector<32x32xf32>
    %46 = arith.divf %38, %45 : vector<32x32xf32>
    %47 = vector.broadcast %35 : vector<1x32xf32> to vector<32x32xf32>
    %48 = arith.mulf %46, %47 : vector<32x32xf32>
    %c1 = arith.constant 1 : index
    %c0_25 = arith.constant 0 : index
    %c0_26 = arith.constant 0 : index
    %49 = vector.load %arg3[%c1, %c0_25, %c0_26] : memref<4x64x32xf32, #tpu.memory_space<vmem>>, vector<1x64x32xf32>
    %50 = vector.shape_cast %49 : vector<1x64x32xf32> to vector<64x32xf32>
    %cst_27 = arith.constant dense<0.000000e+00> : vector<32x32xf32>
    %51 = tpu.matmul %19, %50, %cst_27 {dimension_numbers = #tpu.dot_dimension_numbers<[1], [0], [0], [1], [0, 0, 1, 1], [], []>} : vector<32x64xf32>, vector<64x32xf32>, vector<32x32xf32> -> vector<32x32xf32>
    %52 = arith.mulf %51, %51 : vector<32x32xf32>
    %cst_28 = arith.constant dense<0.000000e+00> : vector<32xf32>
    %53 = vector.multi_reduction <add>, %52, %cst_28 [1] : vector<32x32xf32> to vector<32xf32>
    %54 = vector.shape_cast %53 : vector<32xf32> to vector<32x1xf32>
    %55 = math.sqrt %54 : vector<32x1xf32>
    %cst_29 = arith.constant 9.99999996E-13 : f32
    %56 = vector.broadcast %cst_29 : f32 to vector<32x1xf32>
    %57 = arith.maximumf %55, %56 : vector<32x1xf32>
    %58 = vector.broadcast %57 : vector<32x1xf32> to vector<32x32xf32>
    %59 = arith.divf %51, %58 : vector<32x32xf32>
    %60 = vector.broadcast %35 : vector<1x32xf32> to vector<32x32xf32>
    %61 = arith.mulf %59, %60 : vector<32x32xf32>
    %c2 = arith.constant 2 : index
    %c0_30 = arith.constant 0 : index
    %c0_31 = arith.constant 0 : index
    %62 = vector.load %arg3[%c2, %c0_30, %c0_31] : memref<4x64x32xf32, #tpu.memory_space<vmem>>, vector<1x64x32xf32>
    %63 = vector.shape_cast %62 : vector<1x64x32xf32> to vector<64x32xf32>
    %cst_32 = arith.constant dense<0.000000e+00> : vector<32x32xf32>
    %64 = tpu.matmul %19, %63, %cst_32 {dimension_numbers = #tpu.dot_dimension_numbers<[1], [0], [0], [1], [0, 0, 1, 1], [], []>} : vector<32x64xf32>, vector<64x32xf32>, vector<32x32xf32> -> vector<32x32xf32>
    %65 = arith.mulf %64, %64 : vector<32x32xf32>
    %cst_33 = arith.constant dense<0.000000e+00> : vector<32xf32>
    %66 = vector.multi_reduction <add>, %65, %cst_33 [1] : vector<32x32xf32> to vector<32xf32>
    %67 = vector.shape_cast %66 : vector<32xf32> to vector<32x1xf32>
    %68 = math.sqrt %67 : vector<32x1xf32>
    %cst_34 = arith.constant 9.99999996E-13 : f32
    %69 = vector.broadcast %cst_34 : f32 to vector<32x1xf32>
    %70 = arith.maximumf %68, %69 : vector<32x1xf32>
    %71 = vector.broadcast %70 : vector<32x1xf32> to vector<32x32xf32>
    %72 = arith.divf %64, %71 : vector<32x32xf32>
    %73 = vector.broadcast %35 : vector<1x32xf32> to vector<32x32xf32>
    %74 = arith.mulf %72, %73 : vector<32x32xf32>
    %c3 = arith.constant 3 : index
    %c0_35 = arith.constant 0 : index
    %c0_36 = arith.constant 0 : index
    %75 = vector.load %arg3[%c3, %c0_35, %c0_36] : memref<4x64x32xf32, #tpu.memory_space<vmem>>, vector<1x64x32xf32>
    %76 = vector.shape_cast %75 : vector<1x64x32xf32> to vector<64x32xf32>
    %cst_37 = arith.constant dense<0.000000e+00> : vector<32x32xf32>
    %77 = tpu.matmul %19, %76, %cst_37 {dimension_numbers = #tpu.dot_dimension_numbers<[1], [0], [0], [1], [0, 0, 1, 1], [], []>} : vector<32x64xf32>, vector<64x32xf32>, vector<32x32xf32> -> vector<32x32xf32>
    %78 = arith.mulf %77, %77 : vector<32x32xf32>
    %cst_38 = arith.constant dense<0.000000e+00> : vector<32xf32>
    %79 = vector.multi_reduction <add>, %78, %cst_38 [1] : vector<32x32xf32> to vector<32xf32>
    %80 = vector.shape_cast %79 : vector<32xf32> to vector<32x1xf32>
    %81 = math.sqrt %80 : vector<32x1xf32>
    %cst_39 = arith.constant 9.99999996E-13 : f32
    %82 = vector.broadcast %cst_39 : f32 to vector<32x1xf32>
    %83 = arith.maximumf %81, %82 : vector<32x1xf32>
    %84 = vector.broadcast %83 : vector<32x1xf32> to vector<32x32xf32>
    %85 = arith.divf %77, %84 : vector<32x32xf32>
    %86 = vector.broadcast %35 : vector<1x32xf32> to vector<32x32xf32>
    %87 = arith.mulf %85, %86 : vector<32x32xf32>
    %c0_40 = arith.constant 0 : index
    %c0_41 = arith.constant 0 : index
    %88 = vector.load %arg6[%c0_40, %c0_41] : memref<1x32xf32, #tpu.memory_space<vmem>>, vector<1x32xf32>
    %c0_42 = arith.constant 0 : index
    %c0_43 = arith.constant 0 : index
    %89 = vector.load %arg7[%c0_42, %c0_43] : memref<1x32xf32, #tpu.memory_space<vmem>>, vector<1x32xf32>
    %90 = vector.extract_strided_slice %32 {offsets = [0, 0], sizes = [16, 32], strides = [1, 1]} : vector<32x32xf32> to vector<16x32xf32>
    %91 = vector.extract_strided_slice %34 {offsets = [0, 0], sizes = [16, 32], strides = [1, 1]} : vector<32x32xf32> to vector<16x32xf32>
    %92 = vector.extract_strided_slice %48 {offsets = [0, 0], sizes = [16, 32], strides = [1, 1]} : vector<32x32xf32> to vector<16x32xf32>
    %93 = vector.extract_strided_slice %61 {offsets = [0, 0], sizes = [16, 32], strides = [1, 1]} : vector<32x32xf32> to vector<16x32xf32>
    %94 = vector.extract_strided_slice %74 {offsets = [0, 0], sizes = [16, 32], strides = [1, 1]} : vector<32x32xf32> to vector<16x32xf32>
    %95 = vector.extract_strided_slice %87 {offsets = [0, 0], sizes = [16, 32], strides = [1, 1]} : vector<32x32xf32> to vector<16x32xf32>
    %96 = tpu.concatenate %92, %93, %94, %95 in 0 : vector<16x32xf32>, vector<16x32xf32>, vector<16x32xf32>, vector<16x32xf32> -> vector<64x32xf32>
    %cst_44 = arith.constant dense<0.000000e+00> : vector<64x16xf32>
    %97 = tpu.matmul %96, %90, %cst_44 {dimension_numbers = #tpu.dot_dimension_numbers<[1], [1], [0], [0], [0, 0, 1, 0], [], []>} : vector<64x32xf32>, vector<16x32xf32>, vector<64x16xf32> -> vector<64x16xf32>
    %98 = vector.broadcast %88 : vector<1x32xf32> to vector<64x32xf32>
    %99 = arith.mulf %96, %98 : vector<64x32xf32>
    %cst_45 = arith.constant dense<0.000000e+00> : vector<64xf32>
    %100 = vector.multi_reduction <add>, %99, %cst_45 [1] : vector<64x32xf32> to vector<64xf32>
    %101 = vector.shape_cast %100 : vector<64xf32> to vector<64x1xf32>
    %cst_46 = arith.constant dense<0xFF800000> : vector<64xf32>
    %102 = vector.multi_reduction <maximumf>, %97, %cst_46 [1] : vector<64x16xf32> to vector<64xf32>
    %103 = vector.shape_cast %102 : vector<64xf32> to vector<64x1xf32>
    %104 = arith.maximumf %103, %101 : vector<64x1xf32>
    %105 = vector.broadcast %104 : vector<64x1xf32> to vector<64x16xf32>
    %106 = arith.subf %97, %105 : vector<64x16xf32>
    %107 = math.exp %106 : vector<64x16xf32>
    %108 = arith.subf %101, %104 : vector<64x1xf32>
    %109 = math.exp %108 : vector<64x1xf32>
    %cst_47 = arith.constant dense<0.000000e+00> : vector<64xf32>
    %110 = vector.multi_reduction <add>, %107, %cst_47 [1] : vector<64x16xf32> to vector<64xf32>
    %111 = vector.shape_cast %110 : vector<64xf32> to vector<64x1xf32>
    %112 = arith.addf %111, %109 : vector<64x1xf32>
    %113 = tpu.reciprocal %112 : vector<64x1xf32> -> vector<64x1xf32>
    %cst_48 = arith.constant dense<0.000000e+00> : vector<64x32xf32>
    %114 = tpu.matmul %107, %91, %cst_48 {dimension_numbers = #tpu.dot_dimension_numbers<[1], [0], [0], [1], [0, 0, 1, 1], [], []>} : vector<64x16xf32>, vector<16x32xf32>, vector<64x32xf32> -> vector<64x32xf32>
    %115 = vector.broadcast %109 : vector<64x1xf32> to vector<64x32xf32>
    %116 = vector.broadcast %89 : vector<1x32xf32> to vector<64x32xf32>
    %117 = arith.mulf %115, %116 : vector<64x32xf32>
    %118 = arith.addf %114, %117 : vector<64x32xf32>
    %119 = vector.broadcast %113 : vector<64x1xf32> to vector<64x32xf32>
    %120 = arith.mulf %118, %119 : vector<64x32xf32>
    %121 = vector.extract_strided_slice %120 {offsets = [0, 0], sizes = [16, 32], strides = [1, 1]} : vector<64x32xf32> to vector<16x32xf32>
    %122 = vector.extract_strided_slice %120 {offsets = [16, 0], sizes = [16, 32], strides = [1, 1]} : vector<64x32xf32> to vector<16x32xf32>
    %123 = vector.extract_strided_slice %120 {offsets = [32, 0], sizes = [16, 32], strides = [1, 1]} : vector<64x32xf32> to vector<16x32xf32>
    %124 = vector.extract_strided_slice %120 {offsets = [48, 0], sizes = [16, 32], strides = [1, 1]} : vector<64x32xf32> to vector<16x32xf32>
    %125 = vector.extract_strided_slice %32 {offsets = [16, 0], sizes = [16, 32], strides = [1, 1]} : vector<32x32xf32> to vector<16x32xf32>
    %126 = vector.extract_strided_slice %34 {offsets = [16, 0], sizes = [16, 32], strides = [1, 1]} : vector<32x32xf32> to vector<16x32xf32>
    %127 = vector.extract_strided_slice %48 {offsets = [16, 0], sizes = [16, 32], strides = [1, 1]} : vector<32x32xf32> to vector<16x32xf32>
    %128 = vector.extract_strided_slice %61 {offsets = [16, 0], sizes = [16, 32], strides = [1, 1]} : vector<32x32xf32> to vector<16x32xf32>
    %129 = vector.extract_strided_slice %74 {offsets = [16, 0], sizes = [16, 32], strides = [1, 1]} : vector<32x32xf32> to vector<16x32xf32>
    %130 = vector.extract_strided_slice %87 {offsets = [16, 0], sizes = [16, 32], strides = [1, 1]} : vector<32x32xf32> to vector<16x32xf32>
    %131 = tpu.concatenate %127, %128, %129, %130 in 0 : vector<16x32xf32>, vector<16x32xf32>, vector<16x32xf32>, vector<16x32xf32> -> vector<64x32xf32>
    %cst_49 = arith.constant dense<0.000000e+00> : vector<64x16xf32>
    %132 = tpu.matmul %131, %125, %cst_49 {dimension_numbers = #tpu.dot_dimension_numbers<[1], [1], [0], [0], [0, 0, 1, 0], [], []>} : vector<64x32xf32>, vector<16x32xf32>, vector<64x16xf32> -> vector<64x16xf32>
    %133 = vector.broadcast %88 : vector<1x32xf32> to vector<64x32xf32>
    %134 = arith.mulf %131, %133 : vector<64x32xf32>
    %cst_50 = arith.constant dense<0.000000e+00> : vector<64xf32>
    %135 = vector.multi_reduction <add>, %134, %cst_50 [1] : vector<64x32xf32> to vector<64xf32>
    %136 = vector.shape_cast %135 : vector<64xf32> to vector<64x1xf32>
    %cst_51 = arith.constant dense<0xFF800000> : vector<64xf32>
    %137 = vector.multi_reduction <maximumf>, %132, %cst_51 [1] : vector<64x16xf32> to vector<64xf32>
    %138 = vector.shape_cast %137 : vector<64xf32> to vector<64x1xf32>
    %139 = arith.maximumf %138, %136 : vector<64x1xf32>
    %140 = vector.broadcast %139 : vector<64x1xf32> to vector<64x16xf32>
    %141 = arith.subf %132, %140 : vector<64x16xf32>
    %142 = math.exp %141 : vector<64x16xf32>
    %143 = arith.subf %136, %139 : vector<64x1xf32>
    %144 = math.exp %143 : vector<64x1xf32>
    %cst_52 = arith.constant dense<0.000000e+00> : vector<64xf32>
    %145 = vector.multi_reduction <add>, %142, %cst_52 [1] : vector<64x16xf32> to vector<64xf32>
    %146 = vector.shape_cast %145 : vector<64xf32> to vector<64x1xf32>
    %147 = arith.addf %146, %144 : vector<64x1xf32>
    %148 = tpu.reciprocal %147 : vector<64x1xf32> -> vector<64x1xf32>
    %cst_53 = arith.constant dense<0.000000e+00> : vector<64x32xf32>
    %149 = tpu.matmul %142, %126, %cst_53 {dimension_numbers = #tpu.dot_dimension_numbers<[1], [0], [0], [1], [0, 0, 1, 1], [], []>} : vector<64x16xf32>, vector<16x32xf32>, vector<64x32xf32> -> vector<64x32xf32>
    %150 = vector.broadcast %144 : vector<64x1xf32> to vector<64x32xf32>
    %151 = vector.broadcast %89 : vector<1x32xf32> to vector<64x32xf32>
    %152 = arith.mulf %150, %151 : vector<64x32xf32>
    %153 = arith.addf %149, %152 : vector<64x32xf32>
    %154 = vector.broadcast %148 : vector<64x1xf32> to vector<64x32xf32>
    %155 = arith.mulf %153, %154 : vector<64x32xf32>
    %156 = vector.extract_strided_slice %155 {offsets = [0, 0], sizes = [16, 32], strides = [1, 1]} : vector<64x32xf32> to vector<16x32xf32>
    %157 = vector.extract_strided_slice %155 {offsets = [16, 0], sizes = [16, 32], strides = [1, 1]} : vector<64x32xf32> to vector<16x32xf32>
    %158 = vector.extract_strided_slice %155 {offsets = [32, 0], sizes = [16, 32], strides = [1, 1]} : vector<64x32xf32> to vector<16x32xf32>
    %159 = vector.extract_strided_slice %155 {offsets = [48, 0], sizes = [16, 32], strides = [1, 1]} : vector<64x32xf32> to vector<16x32xf32>
    %cst_54 = arith.constant 0.000000e+00 : f32
    %160 = vector.broadcast %cst_54 : f32 to vector<32x64xf32>
    %161 = tpu.concatenate %121, %156 in 0 : vector<16x32xf32>, vector<16x32xf32> -> vector<32x32xf32>
    %c0_55 = arith.constant 0 : index
    %c0_56 = arith.constant 0 : index
    %c0_57 = arith.constant 0 : index
    %162 = vector.load %arg10[%c0_55, %c0_56, %c0_57] : memref<4x32x64xf32, #tpu.memory_space<vmem>>, vector<1x32x64xf32>
    %163 = vector.shape_cast %162 : vector<1x32x64xf32> to vector<32x64xf32>
    %cst_58 = arith.constant dense<0.000000e+00> : vector<32x64xf32>
    %164 = tpu.matmul %161, %163, %cst_58 {dimension_numbers = #tpu.dot_dimension_numbers<[1], [0], [0], [1], [0, 0, 1, 1], [], []>} : vector<32x32xf32>, vector<32x64xf32>, vector<32x64xf32> -> vector<32x64xf32>
    %165 = arith.addf %160, %164 : vector<32x64xf32>
    %166 = tpu.concatenate %122, %157 in 0 : vector<16x32xf32>, vector<16x32xf32> -> vector<32x32xf32>
    %c1_59 = arith.constant 1 : index
    %c0_60 = arith.constant 0 : index
    %c0_61 = arith.constant 0 : index
    %167 = vector.load %arg10[%c1_59, %c0_60, %c0_61] : memref<4x32x64xf32, #tpu.memory_space<vmem>>, vector<1x32x64xf32>
    %168 = vector.shape_cast %167 : vector<1x32x64xf32> to vector<32x64xf32>
    %cst_62 = arith.constant dense<0.000000e+00> : vector<32x64xf32>
    %169 = tpu.matmul %166, %168, %cst_62 {dimension_numbers = #tpu.dot_dimension_numbers<[1], [0], [0], [1], [0, 0, 1, 1], [], []>} : vector<32x32xf32>, vector<32x64xf32>, vector<32x64xf32> -> vector<32x64xf32>
    %170 = arith.addf %165, %169 : vector<32x64xf32>
    %171 = tpu.concatenate %123, %158 in 0 : vector<16x32xf32>, vector<16x32xf32> -> vector<32x32xf32>
    %c2_63 = arith.constant 2 : index
    %c0_64 = arith.constant 0 : index
    %c0_65 = arith.constant 0 : index
    %172 = vector.load %arg10[%c2_63, %c0_64, %c0_65] : memref<4x32x64xf32, #tpu.memory_space<vmem>>, vector<1x32x64xf32>
    %173 = vector.shape_cast %172 : vector<1x32x64xf32> to vector<32x64xf32>
    %cst_66 = arith.constant dense<0.000000e+00> : vector<32x64xf32>
    %174 = tpu.matmul %171, %173, %cst_66 {dimension_numbers = #tpu.dot_dimension_numbers<[1], [0], [0], [1], [0, 0, 1, 1], [], []>} : vector<32x32xf32>, vector<32x64xf32>, vector<32x64xf32> -> vector<32x64xf32>
    %175 = arith.addf %170, %174 : vector<32x64xf32>
    %176 = tpu.concatenate %124, %159 in 0 : vector<16x32xf32>, vector<16x32xf32> -> vector<32x32xf32>
    %c3_67 = arith.constant 3 : index
    %c0_68 = arith.constant 0 : index
    %c0_69 = arith.constant 0 : index
    %177 = vector.load %arg10[%c3_67, %c0_68, %c0_69] : memref<4x32x64xf32, #tpu.memory_space<vmem>>, vector<1x32x64xf32>
    %178 = vector.shape_cast %177 : vector<1x32x64xf32> to vector<32x64xf32>
    %cst_70 = arith.constant dense<0.000000e+00> : vector<32x64xf32>
    %179 = tpu.matmul %176, %178, %cst_70 {dimension_numbers = #tpu.dot_dimension_numbers<[1], [0], [0], [1], [0, 0, 1, 1], [], []>} : vector<32x32xf32>, vector<32x64xf32>, vector<32x64xf32> -> vector<32x64xf32>
    %180 = arith.addf %175, %179 : vector<32x64xf32>
    %cst_71 = arith.constant dense<0.000000e+00> : vector<32xf32>
    %181 = vector.multi_reduction <add>, %180, %cst_71 [1] : vector<32x64xf32> to vector<32xf32>
    %182 = vector.shape_cast %181 : vector<32xf32> to vector<32x1xf32>
    %cst_72 = arith.constant 6.400000e+01 : f32
    %183 = vector.broadcast %cst_72 : f32 to vector<32x1xf32>
    %184 = arith.divf %182, %183 : vector<32x1xf32>
    %185 = vector.broadcast %184 : vector<32x1xf32> to vector<32x64xf32>
    %186 = arith.subf %180, %185 : vector<32x64xf32>
    %187 = arith.mulf %186, %186 : vector<32x64xf32>
    %cst_73 = arith.constant dense<0.000000e+00> : vector<32xf32>
    %188 = vector.multi_reduction <add>, %187, %cst_73 [1] : vector<32x64xf32> to vector<32xf32>
    %189 = vector.shape_cast %188 : vector<32xf32> to vector<32x1xf32>
    %cst_74 = arith.constant 6.400000e+01 : f32
    %190 = vector.broadcast %cst_74 : f32 to vector<32x1xf32>
    %191 = arith.divf %189, %190 : vector<32x1xf32>
    %cst_75 = arith.constant 9.99999974E-6 : f32
    %192 = vector.broadcast %cst_75 : f32 to vector<32x1xf32>
    %193 = arith.addf %191, %192 : vector<32x1xf32>
    %194 = math.rsqrt %193 : vector<32x1xf32>
    %195 = vector.broadcast %194 : vector<32x1xf32> to vector<32x64xf32>
    %196 = arith.mulf %186, %195 : vector<32x64xf32>
    %c0_76 = arith.constant 0 : index
    %c0_77 = arith.constant 0 : index
    %197 = vector.load %arg11[%c0_76, %c0_77] : memref<1x64xf32, #tpu.memory_space<vmem>>, vector<1x64xf32>
    %198 = vector.broadcast %197 : vector<1x64xf32> to vector<32x64xf32>
    %199 = arith.mulf %196, %198 : vector<32x64xf32>
    %c0_78 = arith.constant 0 : index
    %c0_79 = arith.constant 0 : index
    %200 = vector.load %arg12[%c0_78, %c0_79] : memref<32x64xf32, #tpu.memory_space<vmem>>, vector<32x64xf32>
    tpu.vector_store %arg12[%c0_78, %c0_79], %199 {strides = array<i32>} : memref<32x64xf32, #tpu.memory_space<vmem>>, vector<32x64xf32>,
    return
  }
  func.func @transform_0(%arg0: i32) -> (i32, i32) {
    %c0_i32 = arith.constant 0 : i32
    %c0_i32_0 = arith.constant 0 : i32
    return %arg0, %c0_i32 : i32, i32
  }
  func.func @transform_1(%arg0: i32) -> (i32, i32) {
    %c0_i32 = arith.constant 0 : i32
    %c0_i32_0 = arith.constant 0 : i32
    %c0_i32_1 = arith.constant 0 : i32
    return %c0_i32, %c0_i32_0 : i32, i32
  }
  func.func @transform_2(%arg0: i32) -> (i32, i32, i32) {
    %c0_i32 = arith.constant 0 : i32
    %c0_i32_0 = arith.constant 0 : i32
    %c0_i32_1 = arith.constant 0 : i32
    %c0_i32_2 = arith.constant 0 : i32
    return %c0_i32, %c0_i32_0, %c0_i32_1 : i32, i32, i32
  }
  func.func @transform_3(%arg0: i32) -> (i32, i32) {
    %c0_i32 = arith.constant 0 : i32
    %c0_i32_0 = arith.constant 0 : i32
    %c0_i32_1 = arith.constant 0 : i32
    return %c0_i32, %c0_i32_0 : i32, i32
  }
  func.func @transform_4(%arg0: i32) -> (i32, i32) {
    %c0_i32 = arith.constant 0 : i32
    %c0_i32_0 = arith.constant 0 : i32
    %c0_i32_1 = arith.constant 0 : i32
    return %c0_i32, %c0_i32_0 : i32, i32
  }
  func.func @transform_5(%arg0: i32) -> (i32, i32) {
    %c0_i32 = arith.constant 0 : i32
    %c0_i32_0 = arith.constant 0 : i32
    %c0_i32_1 = arith.constant 0 : i32
    return %c0_i32, %c0_i32_0 : i32, i32
  }
  func.func @transform_6(%arg0: i32) -> (i32, i32) {
    %c0_i32 = arith.constant 0 : i32
    %c0_i32_0 = arith.constant 0 : i32
    %c0_i32_1 = arith.constant 0 : i32
    return %c0_i32, %c0_i32_0 : i32, i32
  }
  func.func @transform_7(%arg0: i32) -> (i32, i32) {
    %c0_i32 = arith.constant 0 : i32
    %c0_i32_0 = arith.constant 0 : i32
    %c0_i32_1 = arith.constant 0 : i32
    return %c0_i32, %c0_i32_0 : i32, i32
  }
  func.func @transform_8(%arg0: i32) -> (i32, i32) {
    %c0_i32 = arith.constant 0 : i32
    %c0_i32_0 = arith.constant 0 : i32
    %c0_i32_1 = arith.constant 0 : i32
    return %c0_i32, %c0_i32_0 : i32, i32
  }
  func.func @transform_9(%arg0: i32) -> (i32, i32, i32) {
    %c0_i32 = arith.constant 0 : i32
    %c0_i32_0 = arith.constant 0 : i32
    %c0_i32_1 = arith.constant 0 : i32
    %c0_i32_2 = arith.constant 0 : i32
    return %c0_i32, %c0_i32_0, %c0_i32_1 : i32, i32, i32
  }
  func.func @transform_10(%arg0: i32) -> (i32, i32) {
    %c0_i32 = arith.constant 0 : i32
    %c0_i32_0 = arith.constant 0 : i32
    %c0_i32_1 = arith.constant 0 : i32
    return %c0_i32, %c0_i32_0 : i32, i32
  }
  func.func @transform_11(%arg0: i32) -> (i32, i32) {
    %c0_i32 = arith.constant 0 : i32
    %c0_i32_0 = arith.constant 0 : i32
    return %arg0, %c0_i32 : i32, i32
  }
}

</mosaic_0001>

<llo_original>
// kernel: tpu_custom_call.1
$region0: #{tpu_custom_call.1}
  #allocation0 [shape = 'u32[]', space=smem, size = 0x4, offset = 0x4, fixed_abs, tag = 'smem constant byte address 0x4 - core index']
  #allocation1 [shape = 'u32[144,128]{1,0:T(1,128)}', space=vmem, size = 0x12000, scoped, tag = 'internal scratch']
  %s0 = inlined_call_operand.vmem [shape: f32[32,64], index: 0, kind: input, shape index: {}]
  %s1 = inlined_call_operand.vmem [shape: f32[1,64], index: 1, kind: input, shape index: {}]
  %s2 = inlined_call_operand.vmem [shape: f32[4,64,32], index: 2, kind: input, shape index: {}]
  %s3 = inlined_call_operand.vmem [shape: f32[64,32], index: 3, kind: input, shape index: {}]
  %s4 = inlined_call_operand.vmem [shape: f32[64,32], index: 4, kind: input, shape index: {}]
  %s5 = inlined_call_operand.vmem [shape: f32[1,32], index: 5, kind: input, shape index: {}]
  %s6 = inlined_call_operand.vmem [shape: f32[1,32], index: 6, kind: input, shape index: {}]
  %s7 = inlined_call_operand.vmem [shape: f32[1,32], index: 7, kind: input, shape index: {}]
  %s8 = inlined_call_operand.vmem [shape: f32[1,32], index: 8, kind: input, shape index: {}]
  %s9 = inlined_call_operand.vmem [shape: f32[4,32,64], index: 9, kind: input, shape index: {}]
  %s10 = inlined_call_operand.vmem [shape: f32[1,64], index: 10, kind: input, shape index: {}]
  %s11 = inlined_call_operand.hbm [shape: f32[32,64], index: 11, kind: output, shape index: {}]
  %s12 = sld [smem:[#allocation0]]
  $region54: #{tpu_custom_call.1} parent=0
    _
  %s14 = ssub.s32 1, %s12
  %s15 = scalar_select 0, %s14, %s12
  $region1: #{tpu_custom_call.1} parent=0
    #allocation2 [shape = 'u8[16384]{0}', space=vmem, size = 0x4000, scoped, tag = 'output window, operand 0, single buffered']
    #allocation3 [shape = 's32[1]{0}', space=sflag, size = 0x4, scoped, tag = 'scoped memory for tpu_custom_call.1']
    %16 = vsyncpa [#allocation3], 0
    // Predicated region
    $region2: #{tpu_custom_call.1} parent=1 // pred_check
      _
    $region3: #{tpu_custom_call.1} parent=1 // pred_check_branch
      %18 = sbr.rel (0) target = $region5
    $region4: #{tpu_custom_call.1} parent=1 // pred_region
      _
    $region5: #{tpu_custom_call.1} parent=1 // pred_fallthru
      _
    // Predicated region
    $region6: #{tpu_custom_call.1} parent=1 // pred_check
      _
    $region7: #{tpu_custom_call.1} parent=1 // pred_check_branch
      %20 = sbr.rel (0) target = $region9
    $region8: #{tpu_custom_call.1} parent=1 // pred_region
      _
    $region9: #{tpu_custom_call.1} parent=1 // pred_fallthru
      _
    // Predicated region
    $region10: #{tpu_custom_call.1} parent=1 // pred_check
      _
    $region11: #{tpu_custom_call.1} parent=1 // pred_check_branch
      %22 = sbr.rel (0) target = $region13
    $region12: #{tpu_custom_call.1} parent=1 // pred_region
      _
    $region13: #{tpu_custom_call.1} parent=1 // pred_fallthru
      _
    // Predicated region
    $region14: #{tpu_custom_call.1} parent=1 // pred_check
      _
    $region15: #{tpu_custom_call.1} parent=1 // pred_check_branch
      %24 = sbr.rel (0) target = $region17
    $region16: #{tpu_custom_call.1} parent=1 // pred_region
      _
    $region17: #{tpu_custom_call.1} parent=1 // pred_fallthru
      _
    // Predicated region
    $region18: #{tpu_custom_call.1} parent=1 // pred_check
      _
    $region19: #{tpu_custom_call.1} parent=1 // pred_check_branch
      %26 = sbr.rel (0) target = $region21
    $region20: #{tpu_custom_call.1} parent=1 // pred_region
      _
    $region21: #{tpu_custom_call.1} parent=1 // pred_fallthru
      _
    // Predicated region
    $region22: #{tpu_custom_call.1} parent=1 // pred_check
      _
    $region23: #{tpu_custom_call.1} parent=1 // pred_check_branch
      %28 = sbr.rel (0) target = $region25
    $region24: #{tpu_custom_call.1} parent=1 // pred_region
      _
    $region25: #{tpu_custom_call.1} parent=1 // pred_fallthru
      _
    // Predicated region
    $region26: #{tpu_custom_call.1} parent=1 // pred_check
      _
    $region27: #{tpu_custom_call.1} parent=1 // pred_check_branch
      %30 = sbr.rel (0) target = $region29
    $region28: #{tpu_custom_call.1} parent=1 // pred_region
      _
    $region29: #{tpu_custom_call.1} parent=1 // pred_fallthru
      _
    // Predicated region
    $region30: #{tpu_custom_call.1} parent=1 // pred_check
      _
    $region31: #{tpu_custom_call.1} parent=1 // pred_check_branch
      %32 = sbr.rel (0) target = $region33
    $region32: #{tpu_custom_call.1} parent=1 // pred_region
      _
    $region33: #{tpu_custom_call.1} parent=1 // pred_fallthru
      _
    // Predicated region
    $region34: #{tpu_custom_call.1} parent=1 // pred_check
      _
    $region35: #{tpu_custom_call.1} parent=1 // pred_check_branch
      %34 = sbr.rel (0) target = $region37
    $region36: #{tpu_custom_call.1} parent=1 // pred_region
      _
    $region37: #{tpu_custom_call.1} parent=1 // pred_fallthru
      _
    // Predicated region
    $region38: #{tpu_custom_call.1} parent=1 // pred_check
      _
    $region39: #{tpu_custom_call.1} parent=1 // pred_check_branch
      %36 = sbr.rel (0) target = $region41
    $region40: #{tpu_custom_call.1} parent=1 // pred_region
      _
    $region41: #{tpu_custom_call.1} parent=1 // pred_fallthru
      _
    // Predicated region
    $region42: #{tpu_custom_call.1} parent=1 // pred_check
      _
    $region43: #{tpu_custom_call.1} parent=1 // pred_check_branch
      %38 = sbr.rel (0) target = $region45
    $region44: #{tpu_custom_call.1} parent=1 // pred_region
      _
    $region45: #{tpu_custom_call.1} parent=1 // pred_fallthru
      _
    %v39 = vld [vmem:[%s0] sm:$0xff]
    %v40 = vld [vmem:[%s0 + $0x8] sm:$0xff]
    %v41 = vld [vmem:[%s0 + $0x10] sm:$0xff]
    %v42 = vld [vmem:[%s0 + $0x18] sm:$0xff]
    %vm43 = vcmask 523264
    %v44 = vsel %vm43, %v39, 0.0
    %45 = vadd.xlane.f32.xlu0 %v44
    %v46 = vpop.xlane.xlu0 %45
    %v47 = vsel %vm43, %v40, 0.0
    %48 = vadd.xlane.f32.xlu0 %v47
    %v49 = vpop.xlane.xlu0 %48
    %v50 = vsel %vm43, %v41, 0.0
    %51 = vadd.xlane.f32.xlu0 %v50
    %v52 = vpop.xlane.xlu0 %51
    %v53 = vsel %vm43, %v42, 0.0
    %54 = vadd.xlane.f32.xlu0 %v53
    %v55 = vpop.xlane.xlu0 %54
    %v56 = vrcp.pop 64.0
    %v57 = vmul.f32 %v46, %v56
    %v58 = vmul.f32 %v49, %v56
    %v59 = vmul.f32 %v52, %v56
    %v60 = vmul.f32 %v55, %v56
    %v61 = vsub.f32 %v39, %v57
    %v62 = vsub.f32 %v40, %v58
    %v63 = vsub.f32 %v41, %v59
    %v64 = vsub.f32 %v42, %v60
    %v65 = vmul.f32 %v61, %v61
    %v66 = vmul.f32 %v62, %v62
    %v67 = vmul.f32 %v63, %v63
    %v68 = vmul.f32 %v64, %v64
    %v69 = vsel %vm43, %v65, 0.0
    %70 = vadd.xlane.f32.xlu0 %v69
    %v71 = vpop.xlane.xlu0 %70
    %v72 = vsel %vm43, %v66, 0.0
    %73 = vadd.xlane.f32.xlu0 %v72
    %v74 = vpop.xlane.xlu0 %73
    %v75 = vsel %vm43, %v67, 0.0
    %76 = vadd.xlane.f32.xlu0 %v75
    %v77 = vpop.xlane.xlu0 %76
    %v78 = vsel %vm43, %v68, 0.0
    %79 = vadd.xlane.f32.xlu0 %v78
    %v80 = vpop.xlane.xlu0 %79
    %v81 = vmul.f32 %v71, %v56
    %v82 = vmul.f32 %v74, %v56
    %v83 = vmul.f32 %v77, %v56
    %v84 = vmul.f32 %v80, %v56
    %v85 = vadd.f32 %v81, 1e-05
    %v86 = vadd.f32 %v82, 1e-05
    %v87 = vadd.f32 %v83, 1e-05
    %v88 = vadd.f32 %v84, 1e-05
    %v89 = vrsqrt.pop %v85
    %v90 = vrsqrt.pop %v86
    %v91 = vrsqrt.pop %v87
    %v92 = vrsqrt.pop %v88
    %v93 = vmul.f32 %v61, %v89
    %v94 = vmul.f32 %v62, %v90
    %v95 = vmul.f32 %v63, %v91
    %v96 = vmul.f32 %v64, %v92
    %v97 = vld [vmem:[%s1] sm:$0x1]
    %v99 = vlaneseq
    %v100 = vshrl.u32 %v99, 7
    %v101 = vsub.s32 0, %v100
    %v102 = vrot.slane %v97, %v101
    %v104 = vmul.f32 %v93, %v102
    %v105 = vmul.f32 %v94, %v102
    %v106 = vmul.f32 %v95, %v102
    %v107 = vmul.f32 %v96, %v102
    %v108 = vld [vmem:[%s8] sm:$0x1]
    %v109 = vld [vmem:[%s3] sm:$0xff]
    %v110 = vld [vmem:[%s3 + $0x8] sm:$0xff]
    %v111 = vld [vmem:[%s3 + $0x10] sm:$0xff]
    %v112 = vld [vmem:[%s3 + $0x18] sm:$0xff]
    %v113 = vld [vmem:[%s3 + $0x20] sm:$0xff]
    %v114 = vld [vmem:[%s3 + $0x28] sm:$0xff]
    %v115 = vld [vmem:[%s3 + $0x30] sm:$0xff]
    %v116 = vld [vmem:[%s3 + $0x38] sm:$0xff]
    %v118 = vsel %vm43, %v104, 0
    %v121 = vsel %vm43, %v105, 0
    %v124 = vsel %vm43, %v106, 0
    %v127 = vsel %vm43, %v107, 0
    %129 = vmatprep.subr.mxu0 0.0
    %130 = vmatpush1.msra.mxu0 %v109
    %131 = vmatprep.subr.mxu0 0.0
    %132 = vmatpush1.msra.mxu0 %v110
    %133 = vmatprep.subr.mxu0 0.0
    %134 = vmatpush1.msra.mxu0 %v111
    %135 = vmatprep.subr.mxu0 0.0
    %136 = vmatpush1.msra.mxu0 %v112
    %137 = vmatprep.subr.mxu0 0.0
    %138 = vmatpush1.msra.mxu0 %v113
    %139 = vmatprep.subr.mxu0 0.0
    %140 = vmatpush1.msra.mxu0 %v114
    %141 = vmatprep.subr.mxu0 0.0
    %142 = vmatpush1.msra.mxu0 %v115
    %143 = vmatprep.subr.mxu0 0.0
    %144 = vmatpush1.msra.mxu0 %v116
    %145 = vmatprep.subr.mxu0 0.0
    %146 = vmatpush1.msra.mxu0 0.0
    %147 = vmatprep.subr.mxu0 0.0
    %148 = vmatpush1.msra.mxu0 0.0
    %149 = vmatprep.subr.mxu0 0.0
    %150 = vmatpush1.msra.mxu0 0.0
    %151 = vmatprep.subr.mxu0 0.0
    %152 = vmatpush1.msra.mxu0 0.0
    %153 = vmatprep.subr.mxu0 0.0
    %154 = vmatpush1.msra.mxu0 0.0
    %155 = vmatprep.subr.mxu0 0.0
    %156 = vmatpush1.msra.mxu0 0.0
    %157 = vmatprep.subr.mxu0 0.0
    %158 = vmatpush1.msra.mxu0 0.0
    %159 = vmatprep.subr.mxu0 0.0
    %160 = vmatpush1.msra.mxu0 0.0
    %161 = vmatprep.subr.mxu0 0.0
    %162 = vmatpush1.msra.mxu0 0.0
    %163 = vmatprep.subr.mxu0 0.0
    %164 = vmatpush1.msra.mxu0 0.0
    %165 = vmatprep.subr.mxu0 0.0
    %166 = vmatpush1.msra.mxu0 0.0
    %167 = vmatprep.subr.mxu0 0.0
    %168 = vmatpush1.msra.mxu0 0.0
    %169 = vmatprep.subr.mxu0 0.0
    %170 = vmatpush1.msra.mxu0 0.0
    %171 = vmatprep.subr.mxu0 0.0
    %172 = vmatpush1.msra.mxu0 0.0
    %173 = vmatprep.subr.mxu0 0.0
    %174 = vmatpush1.msra.mxu0 0.0
    %175 = vmatprep.subr.mxu0 0.0
    %176 = vmatpush1.msra.mxu0 0.0
    %177 = vmatprep.subr.mxu0 0.0
    %178 = vmatpush1.msra.mxu0 0.0
    %179 = vmatprep.subr.mxu0 0.0
    %180 = vmatpush1.msra.mxu0 0.0
    %181 = vmatprep.subr.mxu0 0.0
    %182 = vmatpush1.msra.mxu0 0.0
    %183 = vmatprep.subr.mxu0 0.0
    %184 = vmatpush1.msra.mxu0 0.0
    %185 = vmatprep.subr.mxu0 0.0
    %186 = vmatpush1.msra.mxu0 0.0
    %187 = vmatprep.subr.mxu0 0.0
    %188 = vmatpush1.msra.mxu0 0.0
    %189 = vmatprep.subr.mxu0 0.0
    %190 = vmatpush1.msra.mxu0 0.0
    %191 = vmatprep.subr.mxu0 0.0
    %192 = vmatpush1.msra.mxu0 0.0
    %193 = vmatprep.mubr.f32.mxu0 0.0
    %194 = vmatmul.mubr.f32.gmra.mrb[0].mxu0 %v118
    %v195 = vpop.f32.mrb[0].mxu0
    %v196 = vadd.f32 0.0, %v195
    %v197 = vpop.f32.mrb[0].mxu0
    %198 = vmatprep.mubr.f32.mxu0 0.0
    %199 = vmatmul.mubr.f32.gmra.mrb[0].mxu0 %v121
    %v200 = vpop.f32.mrb[0].mxu0
    %v201 = vadd.f32 0.0, %v200
    %v202 = vpop.f32.mrb[0].mxu0
    %203 = vmatprep.mubr.f32.mxu0 0.0
    %204 = vmatmul.mubr.f32.gmra.mrb[0].mxu0 %v124
    %v205 = vpop.f32.mrb[0].mxu0
    %v206 = vadd.f32 0.0, %v205
    %v207 = vpop.f32.mrb[0].mxu0
    %208 = vmatprep.mubr.f32.mxu0 0.0
    %209 = vmatmul.mubr.f32.gmra.mrb[0].mxu0 %v127
    %v210 = vpop.f32.mrb[0].mxu0
    %v211 = vadd.f32 0.0, %v210
    %v212 = vpop.f32.mrb[0].mxu0
    %213 = vdwg.mxu0
    %v214 = vmul.f32 %v196, %v196
    %v215 = vmul.f32 %v201, %v201
    %v216 = vmul.f32 %v206, %v206
    %v217 = vmul.f32 %v211, %v211
    %vm218 = vcmask 261120
    %v219 = vsel %vm218, %v214, 0.0
    %220 = vadd.xlane.f32.xlu0 %v219
    %v221 = vpop.xlane.xlu0 %220
    %v222 = vsel %vm218, %v215, 0.0
    %223 = vadd.xlane.f32.xlu0 %v222
    %v224 = vpop.xlane.xlu0 %223
    %v225 = vsel %vm218, %v216, 0.0
    %226 = vadd.xlane.f32.xlu0 %v225
    %v227 = vpop.xlane.xlu0 %226
    %v228 = vsel %vm218, %v217, 0.0
    %229 = vadd.xlane.f32.xlu0 %v228
    %v230 = vpop.xlane.xlu0 %229
    %v231 = vrsqrt.pop %v221
    %v232 = vmul.f32 %v221, %v231
    %vm233 = vcmp.eq.f32.partialorder %v221, inf
    %v234 = vsel %vm233, %v221, %v232
    %vm235 = vcmp.eq.f32.partialorder %v221, 0.0
    %v236 = vand.u32 %v221, 2147483648
    %v237 = vsel %vm235, %v236, %v234
    %v238 = vrsqrt.pop %v224
    %v239 = vmul.f32 %v224, %v238
    %vm240 = vcmp.eq.f32.partialorder %v224, inf
    %v241 = vsel %vm240, %v224, %v239
    %vm242 = vcmp.eq.f32.partialorder %v224, 0.0
    %v243 = vand.u32 %v224, 2147483648
    %v244 = vsel %vm242, %v243, %v241
    %v245 = vrsqrt.pop %v227
    %v246 = vmul.f32 %v227, %v245
    %vm247 = vcmp.eq.f32.partialorder %v227, inf
    %v248 = vsel %vm247, %v227, %v246
    %vm249 = vcmp.eq.f32.partialorder %v227, 0.0
    %v250 = vand.u32 %v227, 2147483648
    %v251 = vsel %vm249, %v250, %v248
    %v252 = vrsqrt.pop %v230
    %v253 = vmul.f32 %v230, %v252
    %vm254 = vcmp.eq.f32.partialorder %v230, inf
    %v255 = vsel %vm254, %v230, %v253
    %vm256 = vcmp.eq.f32.partialorder %v230, 0.0
    %v257 = vand.u32 %v230, 2147483648
    %v258 = vsel %vm256, %v257, %v255
    %v259 = vmax.f32 %v237, 1e-12
    %v260 = vmax.f32 %v244, 1e-12
    %v261 = vmax.f32 %v251, 1e-12
    %v262 = vmax.f32 %v258, 1e-12
    %v263 = vrcp.pop %v259
    %v264 = vmul.f32 %v196, %v263
    %v265 = vrcp.pop %v260
    %v266 = vmul.f32 %v201, %v265
    %v267 = vrcp.pop %v261
    %v268 = vmul.f32 %v206, %v267
    %v269 = vrcp.pop %v262
    %v270 = vmul.f32 %v211, %v269
    %v272 = vlaneseq
    %v273 = vshrl.u32 %v272, 7
    %v274 = vsub.s32 0, %v273
    %v275 = vrot.slane %v108, %v274
    %v277 = vmul.f32 %v264, %v275
    %v278 = vmul.f32 %v266, %v275
    %v279 = vmul.f32 %v268, %v275
    %v280 = vmul.f32 %v270, %v275
    %v281 = vld [vmem:[%s4] sm:$0xff]
    %v282 = vld [vmem:[%s4 + $0x8] sm:$0xff]
    %v283 = vld [vmem:[%s4 + $0x10] sm:$0xff]
    %v284 = vld [vmem:[%s4 + $0x18] sm:$0xff]
    %v285 = vld [vmem:[%s4 + $0x20] sm:$0xff]
    %v286 = vld [vmem:[%s4 + $0x28] sm:$0xff]
    %v287 = vld [vmem:[%s4 + $0x30] sm:$0xff]
    %v288 = vld [vmem:[%s4 + $0x38] sm:$0xff]
    %289 = vmatprep.subr.mxu0 0.0
    %290 = vmatpush1.msra.mxu0 %v281
    %291 = vmatprep.subr.mxu0 0.0
    %292 = vmatpush1.msra.mxu0 %v282
    %293 = vmatprep.subr.mxu0 0.0
    %294 = vmatpush1.msra.mxu0 %v283
    %295 = vmatprep.subr.mxu0 0.0
    %296 = vmatpush1.msra.mxu0 %v284
    %297 = vmatprep.subr.mxu0 0.0
    %298 = vmatpush1.msra.mxu0 %v285
    %299 = vmatprep.subr.mxu0 0.0
    %300 = vmatpush1.msra.mxu0 %v286
    %301 = vmatprep.subr.mxu0 0.0
    %302 = vmatpush1.msra.mxu0 %v287
    %303 = vmatprep.subr.mxu0 0.0
    %304 = vmatpush1.msra.mxu0 %v288
    %305 = vmatprep.subr.mxu0 0.0
    %306 = vmatpush1.msra.mxu0 0.0
    %307 = vmatprep.subr.mxu0 0.0
    %308 = vmatpush1.msra.mxu0 0.0
    %309 = vmatprep.subr.mxu0 0.0
    %310 = vmatpush1.msra.mxu0 0.0
    %311 = vmatprep.subr.mxu0 0.0
    %312 = vmatpush1.msra.mxu0 0.0
    %313 = vmatprep.subr.mxu0 0.0
    %314 = vmatpush1.msra.mxu0 0.0
    %315 = vmatprep.subr.mxu0 0.0
    %316 = vmatpush1.msra.mxu0 0.0
    %317 = vmatprep.subr.mxu0 0.0
    %318 = vmatpush1.msra.mxu0 0.0
    %319 = vmatprep.subr.mxu0 0.0
    %320 = vmatpush1.msra.mxu0 0.0
    %321 = vmatprep.subr.mxu0 0.0
    %322 = vmatpush1.msra.mxu0 0.0
    %323 = vmatprep.subr.mxu0 0.0
    %324 = vmatpush1.msra.mxu0 0.0
    %325 = vmatprep.subr.mxu0 0.0
    %326 = vmatpush1.msra.mxu0 0.0
    %327 = vmatprep.subr.mxu0 0.0
    %328 = vmatpush1.msra.mxu0 0.0
    %329 = vmatprep.subr.mxu0 0.0
    %330 = vmatpush1.msra.mxu0 0.0
    %331 = vmatprep.subr.mxu0 0.0
    %332 = vmatpush1.msra.mxu0 0.0
    %333 = vmatprep.subr.mxu0 0.0
    %334 = vmatpush1.msra.mxu0 0.0
    %335 = vmatprep.subr.mxu0 0.0
    %336 = vmatpush1.msra.mxu0 0.0
    %337 = vmatprep.subr.mxu0 0.0
    %338 = vmatpush1.msra.mxu0 0.0
    %339 = vmatprep.subr.mxu0 0.0
    %340 = vmatpush1.msra.mxu0 0.0
    %341 = vmatprep.subr.mxu0 0.0
    %342 = vmatpush1.msra.mxu0 0.0
    %343 = vmatprep.subr.mxu0 0.0
    %344 = vmatpush1.msra.mxu0 0.0
    %345 = vmatprep.subr.mxu0 0.0
    %346 = vmatpush1.msra.mxu0 0.0
    %347 = vmatprep.subr.mxu0 0.0
    %348 = vmatpush1.msra.mxu0 0.0
    %349 = vmatprep.subr.mxu0 0.0
    %350 = vmatpush1.msra.mxu0 0.0
    %351 = vmatprep.subr.mxu0 0.0
    %352 = vmatpush1.msra.mxu0 0.0
    %353 = vmatprep.mubr.f32.mxu0 0.0
    %354 = vmatmul.mubr.f32.gmra.mrb[0].mxu0 %v118
    %v355 = vpop.f32.mrb[0].mxu0
    %v356 = vadd.f32 0.0, %v355
    %v357 = vpop.f32.mrb[0].mxu0
    %358 = vmatprep.mubr.f32.mxu0 0.0
    %359 = vmatmul.mubr.f32.gmra.mrb[0].mxu0 %v121
    %v360 = vpop.f32.mrb[0].mxu0
    %v361 = vadd.f32 0.0, %v360
    %v362 = vpop.f32.mrb[0].mxu0
    %363 = vmatprep.mubr.f32.mxu0 0.0
    %364 = vmatmul.mubr.f32.gmra.mrb[0].mxu0 %v124
    %v365 = vpop.f32.mrb[0].mxu0
    %v366 = vadd.f32 0.0, %v365
    %v367 = vpop.f32.mrb[0].mxu0
    %368 = vmatprep.mubr.f32.mxu0 0.0
    %369 = vmatmul.mubr.f32.gmra.mrb[0].mxu0 %v127
    %v370 = vpop.f32.mrb[0].mxu0
    %v371 = vadd.f32 0.0, %v370
    %v372 = vpop.f32.mrb[0].mxu0
    %373 = vdwg.mxu0
    %v374 = vld [vmem:[%s7] sm:$0x1]
    %v375 = vld [vmem:[%s2] sm:$0xff]
    %v376 = vld [vmem:[%s2 + $0x8] sm:$0xff]
    %v377 = vld [vmem:[%s2 + $0x10] sm:$0xff]
    %v378 = vld [vmem:[%s2 + $0x18] sm:$0xff]
    %v379 = vld [vmem:[%s2 + $0x20] sm:$0xff]
    %v380 = vld [vmem:[%s2 + $0x28] sm:$0xff]
    %v381 = vld [vmem:[%s2 + $0x30] sm:$0xff]
    %v382 = vld [vmem:[%s2 + $0x38] sm:$0xff]
    %383 = vmatprep.subr.mxu0 0.0
    %384 = vmatpush1.msra.mxu0 %v375
    %385 = vmatprep.subr.mxu0 0.0
    %386 = vmatpush1.msra.mxu0 %v376
    %387 = vmatprep.subr.mxu0 0.0
    %388 = vmatpush1.msra.mxu0 %v377
    %389 = vmatprep.subr.mxu0 0.0
    %390 = vmatpush1.msra.mxu0 %v378
    %391 = vmatprep.subr.mxu0 0.0
    %392 = vmatpush1.msra.mxu0 %v379
    %393 = vmatprep.subr.mxu0 0.0
    %394 = vmatpush1.msra.mxu0 %v380
    %395 = vmatprep.subr.mxu0 0.0
    %396 = vmatpush1.msra.mxu0 %v381
    %397 = vmatprep.subr.mxu0 0.0
    %398 = vmatpush1.msra.mxu0 %v382
    %399 = vmatprep.subr.mxu0 0.0
    %400 = vmatpush1.msra.mxu0 0.0
    %401 = vmatprep.subr.mxu0 0.0
    %402 = vmatpush1.msra.mxu0 0.0
    %403 = vmatprep.subr.mxu0 0.0
    %404 = vmatpush1.msra.mxu0 0.0
    %405 = vmatprep.subr.mxu0 0.0
    %406 = vmatpush1.msra.mxu0 0.0
    %407 = vmatprep.subr.mxu0 0.0
    %408 = vmatpush1.msra.mxu0 0.0
    %409 = vmatprep.subr.mxu0 0.0
    %410 = vmatpush1.msra.mxu0 0.0
    %411 = vmatprep.subr.mxu0 0.0
    %412 = vmatpush1.msra.mxu0 0.0
    %413 = vmatprep.subr.mxu0 0.0
    %414 = vmatpush1.msra.mxu0 0.0
    %415 = vmatprep.subr.mxu0 0.0
    %416 = vmatpush1.msra.mxu0 0.0
    %417 = vmatprep.subr.mxu0 0.0
    %418 = vmatpush1.msra.mxu0 0.0
    %419 = vmatprep.subr.mxu0 0.0
    %420 = vmatpush1.msra.mxu0 0.0
    %421 = vmatprep.subr.mxu0 0.0
    %422 = vmatpush1.msra.mxu0 0.0
    %423 = vmatprep.subr.mxu0 0.0
    %424 = vmatpush1.msra.mxu0 0.0
    %425 = vmatprep.subr.mxu0 0.0
    %426 = vmatpush1.msra.mxu0 0.0
    %427 = vmatprep.subr.mxu0 0.0
    %428 = vmatpush1.msra.mxu0 0.0
    %429 = vmatprep.subr.mxu0 0.0
    %430 = vmatpush1.msra.mxu0 0.0
    %431 = vmatprep.subr.mxu0 0.0
    %432 = vmatpush1.msra.mxu0 0.0
    %433 = vmatprep.subr.mxu0 0.0
    %434 = vmatpush1.msra.mxu0 0.0
    %435 = vmatprep.subr.mxu0 0.0
    %436 = vmatpush1.msra.mxu0 0.0
    %437 = vmatprep.subr.mxu0 0.0
    %438 = vmatpush1.msra.mxu0 0.0
    %439 = vmatprep.subr.mxu0 0.0
    %440 = vmatpush1.msra.mxu0 0.0
    %441 = vmatprep.subr.mxu0 0.0
    %442 = vmatpush1.msra.mxu0 0.0
    %443 = vmatprep.subr.mxu0 0.0
    %444 = vmatpush1.msra.mxu0 0.0
    %445 = vmatprep.subr.mxu0 0.0
    %446 = vmatpush1.msra.mxu0 0.0
    %447 = vmatprep.mubr.f32.mxu0 0.0
    %448 = vmatmul.mubr.f32.gmra.mrb[0].mxu0 %v118
    %v449 = vpop.f32.mrb[0].mxu0
    %v450 = vadd.f32 0.0, %v449
    %v451 = vpop.f32.mrb[0].mxu0
    %452 = vmatprep.mubr.f32.mxu0 0.0
    %453 = vmatmul.mubr.f32.gmra.mrb[0].mxu0 %v121
    %v454 = vpop.f32.mrb[0].mxu0
    %v455 = vadd.f32 0.0, %v454
    %v456 = vpop.f32.mrb[0].mxu0
    %457 = vmatprep.mubr.f32.mxu0 0.0
    %458 = vmatmul.mubr.f32.gmra.mrb[0].mxu0 %v124
    %v459 = vpop.f32.mrb[0].mxu0
    %v460 = vadd.f32 0.0, %v459
    %v461 = vpop.f32.mrb[0].mxu0
    %462 = vmatprep.mubr.f32.mxu0 0.0
    %463 = vmatmul.mubr.f32.gmra.mrb[0].mxu0 %v127
    %v464 = vpop.f32.mrb[0].mxu0
    %v465 = vadd.f32 0.0, %v464
    %v466 = vpop.f32.mrb[0].mxu0
    %467 = vdwg.mxu0
    %v468 = vmul.f32 %v450, %v450
    %v469 = vmul.f32 %v455, %v455
    %v470 = vmul.f32 %v460, %v460
    %v471 = vmul.f32 %v465, %v465
    %v472 = vsel %vm218, %v468, 0.0
    %473 = vadd.xlane.f32.xlu0 %v472
    %v474 = vpop.xlane.xlu0 %473
    %v475 = vsel %vm218, %v469, 0.0
    %476 = vadd.xlane.f32.xlu0 %v475
    %v477 = vpop.xlane.xlu0 %476
    %v478 = vsel %vm218, %v470, 0.0
    %479 = vadd.xlane.f32.xlu0 %v478
    %v480 = vpop.xlane.xlu0 %479
    %v481 = vsel %vm218, %v471, 0.0
    %482 = vadd.xlane.f32.xlu0 %v481
    %v483 = vpop.xlane.xlu0 %482
    %v484 = vrsqrt.pop %v474
    %v485 = vmul.f32 %v474, %v484
    %vm486 = vcmp.eq.f32.partialorder %v474, inf
    %v487 = vsel %vm486, %v474, %v485
    %vm488 = vcmp.eq.f32.partialorder %v474, 0.0
    %v489 = vand.u32 %v474, 2147483648
    %v490 = vsel %vm488, %v489, %v487
    %v491 = vrsqrt.pop %v477
    %v492 = vmul.f32 %v477, %v491
    %vm493 = vcmp.eq.f32.partialorder %v477, inf
    %v494 = vsel %vm493, %v477, %v492
    %vm495 = vcmp.eq.f32.partialorder %v477, 0.0
    %v496 = vand.u32 %v477, 2147483648
    %v497 = vsel %vm495, %v496, %v494
    %v498 = vrsqrt.pop %v480
    %v499 = vmul.f32 %v480, %v498
    %vm500 = vcmp.eq.f32.partialorder %v480, inf
    %v501 = vsel %vm500, %v480, %v499
    %vm502 = vcmp.eq.f32.partialorder %v480, 0.0
    %v503 = vand.u32 %v480, 2147483648
    %v504 = vsel %vm502, %v503, %v501
    %v505 = vrsqrt.pop %v483
    %v506 = vmul.f32 %v483, %v505
    %vm507 = vcmp.eq.f32.partialorder %v483, inf
    %v508 = vsel %vm507, %v483, %v506
    %vm509 = vcmp.eq.f32.partialorder %v483, 0.0
    %v510 = vand.u32 %v483, 2147483648
    %v511 = vsel %vm509, %v510, %v508
    %v512 = vmax.f32 %v490, 1e-12
    %v513 = vmax.f32 %v497, 1e-12
    %v514 = vmax.f32 %v504, 1e-12
    %v515 = vmax.f32 %v511, 1e-12
    %v516 = vrcp.pop %v512
    %v517 = vmul.f32 %v450, %v516
    %v518 = vrcp.pop %v513
    %v519 = vmul.f32 %v455, %v518
    %v520 = vrcp.pop %v514
    %v521 = vmul.f32 %v460, %v520
    %v522 = vrcp.pop %v515
    %v523 = vmul.f32 %v465, %v522
    %v525 = vlaneseq
    %v526 = vshrl.u32 %v525, 7
    %v527 = vsub.s32 0, %v526
    %v528 = vrot.slane %v374, %v527
    %v530 = vmul.f32 %v517, %v528
    %v531 = vmul.f32 %v519, %v528
    %v532 = vmul.f32 %v521, %v528
    %v533 = vmul.f32 %v523, %v528
    %s534 = scalar_lea.vmem %s2, 64
    %v535 = vld [vmem:[%s534] sm:$0xff]
    %v536 = vld [vmem:[%s534 + $0x8] sm:$0xff]
    %v537 = vld [vmem:[%s534 + $0x10] sm:$0xff]
    %v538 = vld [vmem:[%s534 + $0x18] sm:$0xff]
    %v539 = vld [vmem:[%s534 + $0x20] sm:$0xff]
    %v540 = vld [vmem:[%s534 + $0x28] sm:$0xff]
    %v541 = vld [vmem:[%s534 + $0x30] sm:$0xff]
    %v542 = vld [vmem:[%s534 + $0x38] sm:$0xff]
    %543 = vmatprep.subr.mxu0 0.0
    %544 = vmatpush1.msra.mxu0 %v535
    %545 = vmatprep.subr.mxu0 0.0
    %546 = vmatpush1.msra.mxu0 %v536
    %547 = vmatprep.subr.mxu0 0.0
    %548 = vmatpush1.msra.mxu0 %v537
    %549 = vmatprep.subr.mxu0 0.0
    %550 = vmatpush1.msra.mxu0 %v538
    %551 = vmatprep.subr.mxu0 0.0
    %552 = vmatpush1.msra.mxu0 %v539
    %553 = vmatprep.subr.mxu0 0.0
    %554 = vmatpush1.msra.mxu0 %v540
    %555 = vmatprep.subr.mxu0 0.0
    %556 = vmatpush1.msra.mxu0 %v541
    %557 = vmatprep.subr.mxu0 0.0
    %558 = vmatpush1.msra.mxu0 %v542
    %559 = vmatprep.subr.mxu0 0.0
    %560 = vmatpush1.msra.mxu0 0.0
    %561 = vmatprep.subr.mxu0 0.0
    %562 = vmatpush1.msra.mxu0 0.0
    %563 = vmatprep.subr.mxu0 0.0
    %564 = vmatpush1.msra.mxu0 0.0
    %565 = vmatprep.subr.mxu0 0.0
    %566 = vmatpush1.msra.mxu0 0.0
    %567 = vmatprep.subr.mxu0 0.0
    %568 = vmatpush1.msra.mxu0 0.0
    %569 = vmatprep.subr.mxu0 0.0
    %570 = vmatpush1.msra.mxu0 0.0
    %571 = vmatprep.subr.mxu0 0.0
    %572 = vmatpush1.msra.mxu0 0.0
    %573 = vmatprep.subr.mxu0 0.0
    %574 = vmatpush1.msra.mxu0 0.0
    %575 = vmatprep.subr.mxu0 0.0
    %576 = vmatpush1.msra.mxu0 0.0
    %577 = vmatprep.subr.mxu0 0.0
    %578 = vmatpush1.msra.mxu0 0.0
    %579 = vmatprep.subr.mxu0 0.0
    %580 = vmatpush1.msra.mxu0 0.0
    %581 = vmatprep.subr.mxu0 0.0
    %582 = vmatpush1.msra.mxu0 0.0
    %583 = vmatprep.subr.mxu0 0.0
    %584 = vmatpush1.msra.mxu0 0.0
    %585 = vmatprep.subr.mxu0 0.0
    %586 = vmatpush1.msra.mxu0 0.0
    %587 = vmatprep.subr.mxu0 0.0
    %588 = vmatpush1.msra.mxu0 0.0
    %589 = vmatprep.subr.mxu0 0.0
    %590 = vmatpush1.msra.mxu0 0.0
    %591 = vmatprep.subr.mxu0 0.0
    %592 = vmatpush1.msra.mxu0 0.0
    %593 = vmatprep.subr.mxu0 0.0
    %594 = vmatpush1.msra.mxu0 0.0
    %595 = vmatprep.subr.mxu0 0.0
    %596 = vmatpush1.msra.mxu0 0.0
    %597 = vmatprep.subr.mxu0 0.0
    %598 = vmatpush1.msra.mxu0 0.0
    %599 = vmatprep.subr.mxu0 0.0
    %600 = vmatpush1.msra.mxu0 0.0
    %601 = vmatprep.subr.mxu0 0.0
    %602 = vmatpush1.msra.mxu0 0.0
    %603 = vmatprep.subr.mxu0 0.0
    %604 = vmatpush1.msra.mxu0 0.0
    %605 = vmatprep.subr.mxu0 0.0
    %606 = vmatpush1.msra.mxu0 0.0
    %607 = vmatprep.mubr.f32.mxu0 0.0
    %608 = vmatmul.mubr.f32.gmra.mrb[0].mxu0 %v118
    %v609 = vpop.f32.mrb[0].mxu0
    %v610 = vadd.f32 0.0, %v609
    %v611 = vpop.f32.mrb[0].mxu0
    %612 = vmatprep.mubr.f32.mxu0 0.0
    %613 = vmatmul.mubr.f32.gmra.mrb[0].mxu0 %v121
    %v614 = vpop.f32.mrb[0].mxu0
    %v615 = vadd.f32 0.0, %v614
    %v616 = vpop.f32.mrb[0].mxu0
    %617 = vmatprep.mubr.f32.mxu0 0.0
    %618 = vmatmul.mubr.f32.gmra.mrb[0].mxu0 %v124
    %v619 = vpop.f32.mrb[0].mxu0
    %v620 = vadd.f32 0.0, %v619
    %v621 = vpop.f32.mrb[0].mxu0
    %622 = vmatprep.mubr.f32.mxu0 0.0
    %623 = vmatmul.mubr.f32.gmra.mrb[0].mxu0 %v127
    %v624 = vpop.f32.mrb[0].mxu0
    %v625 = vadd.f32 0.0, %v624
    %v626 = vpop.f32.mrb[0].mxu0
    %627 = vdwg.mxu0
    %v628 = vmul.f32 %v610, %v610
    %v629 = vmul.f32 %v615, %v615
    %v630 = vmul.f32 %v620, %v620
    %v631 = vmul.f32 %v625, %v625
    %v632 = vsel %vm218, %v628, 0.0
    %633 = vadd.xlane.f32.xlu0 %v632
    %v634 = vpop.xlane.xlu0 %633
    %v635 = vsel %vm218, %v629, 0.0
    %636 = vadd.xlane.f32.xlu0 %v635
    %v637 = vpop.xlane.xlu0 %636
    %v638 = vsel %vm218, %v630, 0.0
    %639 = vadd.xlane.f32.xlu0 %v638
    %v640 = vpop.xlane.xlu0 %639
    %v641 = vsel %vm218, %v631, 0.0
    %642 = vadd.xlane.f32.xlu0 %v641
    %v643 = vpop.xlane.xlu0 %642
    %v644 = vrsqrt.pop %v634
    %v645 = vmul.f32 %v634, %v644
    %vm646 = vcmp.eq.f32.partialorder %v634, inf
    %v647 = vsel %vm646, %v634, %v645
    %vm648 = vcmp.eq.f32.partialorder %v634, 0.0
    %v649 = vand.u32 %v634, 2147483648
    %v650 = vsel %vm648, %v649, %v647
    %v651 = vrsqrt.pop %v637
    %v652 = vmul.f32 %v637, %v651
    %vm653 = vcmp.eq.f32.partialorder %v637, inf
    %v654 = vsel %vm653, %v637, %v652
    %vm655 = vcmp.eq.f32.partialorder %v637, 0.0
    %v656 = vand.u32 %v637, 2147483648
    %v657 = vsel %vm655, %v656, %v654
    %v658 = vrsqrt.pop %v640
    %v659 = vmul.f32 %v640, %v658
    %vm660 = vcmp.eq.f32.partialorder %v640, inf
    %v661 = vsel %vm660, %v640, %v659
    %vm662 = vcmp.eq.f32.partialorder %v640, 0.0
    %v663 = vand.u32 %v640, 2147483648
    %v664 = vsel %vm662, %v663, %v661
    %v665 = vrsqrt.pop %v643
    %v666 = vmul.f32 %v643, %v665
    %vm667 = vcmp.eq.f32.partialorder %v643, inf
    %v668 = vsel %vm667, %v643, %v666
    %vm669 = vcmp.eq.f32.partialorder %v643, 0.0
    %v670 = vand.u32 %v643, 2147483648
    %v671 = vsel %vm669, %v670, %v668
    %v672 = vmax.f32 %v650, 1e-12
    %v673 = vmax.f32 %v657, 1e-12
    %v674 = vmax.f32 %v664, 1e-12
    %v675 = vmax.f32 %v671, 1e-12
    %v676 = vrcp.pop %v672
    %v677 = vmul.f32 %v610, %v676
    %v678 = vrcp.pop %v673
    %v679 = vmul.f32 %v615, %v678
    %v680 = vrcp.pop %v674
    %v681 = vmul.f32 %v620, %v680
    %v682 = vrcp.pop %v675
    %v683 = vmul.f32 %v625, %v682
    %v684 = vmul.f32 %v677, %v528
    %v685 = vmul.f32 %v679, %v528
    %v686 = vmul.f32 %v681, %v528
    %v687 = vmul.f32 %v683, %v528
    %s688 = scalar_lea.vmem %s2, 128
    %v689 = vld [vmem:[%s688] sm:$0xff]
    %v690 = vld [vmem:[%s688 + $0x8] sm:$0xff]
    %v691 = vld [vmem:[%s688 + $0x10] sm:$0xff]
    %v692 = vld [vmem:[%s688 + $0x18] sm:$0xff]
    %v693 = vld [vmem:[%s688 + $0x20] sm:$0xff]
    %v694 = vld [vmem:[%s688 + $0x28] sm:$0xff]
    %v695 = vld [vmem:[%s688 + $0x30] sm:$0xff]
    %v696 = vld [vmem:[%s688 + $0x38] sm:$0xff]
    %697 = vmatprep.subr.mxu0 0.0
    %698 = vmatpush1.msra.mxu0 %v689
    %699 = vmatprep.subr.mxu0 0.0
    %700 = vmatpush1.msra.mxu0 %v690
    %701 = vmatprep.subr.mxu0 0.0
    %702 = vmatpush1.msra.mxu0 %v691
    %703 = vmatprep.subr.mxu0 0.0
    %704 = vmatpush1.msra.mxu0 %v692
    %705 = vmatprep.subr.mxu0 0.0
    %706 = vmatpush1.msra.mxu0 %v693
    %707 = vmatprep.subr.mxu0 0.0
    %708 = vmatpush1.msra.mxu0 %v694
    %709 = vmatprep.subr.mxu0 0.0
    %710 = vmatpush1.msra.mxu0 %v695
    %711 = vmatprep.subr.mxu0 0.0
    %712 = vmatpush1.msra.mxu0 %v696
    %713 = vmatprep.subr.mxu0 0.0
    %714 = vmatpush1.msra.mxu0 0.0
    %715 = vmatprep.subr.mxu0 0.0
    %716 = vmatpush1.msra.mxu0 0.0
    %717 = vmatprep.subr.mxu0 0.0
    %718 = vmatpush1.msra.mxu0 0.0
    %719 = vmatprep.subr.mxu0 0.0
    %720 = vmatpush1.msra.mxu0 0.0
    %721 = vmatprep.subr.mxu0 0.0
    %722 = vmatpush1.msra.mxu0 0.0
    %723 = vmatprep.subr.mxu0 0.0
    %724 = vmatpush1.msra.mxu0 0.0
    %725 = vmatprep.subr.mxu0 0.0
    %726 = vmatpush1.msra.mxu0 0.0
    %727 = vmatprep.subr.mxu0 0.0
    %728 = vmatpush1.msra.mxu0 0.0
    %729 = vmatprep.subr.mxu0 0.0
    %730 = vmatpush1.msra.mxu0 0.0
    %731 = vmatprep.subr.mxu0 0.0
    %732 = vmatpush1.msra.mxu0 0.0
    %733 = vmatprep.subr.mxu0 0.0
    %734 = vmatpush1.msra.mxu0 0.0
    %735 = vmatprep.subr.mxu0 0.0
    %736 = vmatpush1.msra.mxu0 0.0
    %737 = vmatprep.subr.mxu0 0.0
    %738 = vmatpush1.msra.mxu0 0.0
    %739 = vmatprep.subr.mxu0 0.0
    %740 = vmatpush1.msra.mxu0 0.0
    %741 = vmatprep.subr.mxu0 0.0
    %742 = vmatpush1.msra.mxu0 0.0
    %743 = vmatprep.subr.mxu0 0.0
    %744 = vmatpush1.msra.mxu0 0.0
    %745 = vmatprep.subr.mxu0 0.0
    %746 = vmatpush1.msra.mxu0 0.0
    %747 = vmatprep.subr.mxu0 0.0
    %748 = vmatpush1.msra.mxu0 0.0
    %749 = vmatprep.subr.mxu0 0.0
    %750 = vmatpush1.msra.mxu0 0.0
    %751 = vmatprep.subr.mxu0 0.0
    %752 = vmatpush1.msra.mxu0 0.0
    %753 = vmatprep.subr.mxu0 0.0
    %754 = vmatpush1.msra.mxu0 0.0
    %755 = vmatprep.subr.mxu0 0.0
    %756 = vmatpush1.msra.mxu0 0.0
    %757 = vmatprep.subr.mxu0 0.0
    %758 = vmatpush1.msra.mxu0 0.0
    %759 = vmatprep.subr.mxu0 0.0
    %760 = vmatpush1.msra.mxu0 0.0
    %761 = vmatprep.mubr.f32.mxu0 0.0
    %762 = vmatmul.mubr.f32.gmra.mrb[0].mxu0 %v118
    %v763 = vpop.f32.mrb[0].mxu0
    %v764 = vadd.f32 0.0, %v763
    %v765 = vpop.f32.mrb[0].mxu0
    %766 = vmatprep.mubr.f32.mxu0 0.0
    %767 = vmatmul.mubr.f32.gmra.mrb[0].mxu0 %v121
    %v768 = vpop.f32.mrb[0].mxu0
    %v769 = vadd.f32 0.0, %v768
    %v770 = vpop.f32.mrb[0].mxu0
    %771 = vmatprep.mubr.f32.mxu0 0.0
    %772 = vmatmul.mubr.f32.gmra.mrb[0].mxu0 %v124
    %v773 = vpop.f32.mrb[0].mxu0
    %v774 = vadd.f32 0.0, %v773
    %v775 = vpop.f32.mrb[0].mxu0
    %776 = vmatprep.mubr.f32.mxu0 0.0
    %777 = vmatmul.mubr.f32.gmra.mrb[0].mxu0 %v127
    %v778 = vpop.f32.mrb[0].mxu0
    %v779 = vadd.f32 0.0, %v778
    %v780 = vpop.f32.mrb[0].mxu0
    %781 = vdwg.mxu0
    %v782 = vmul.f32 %v764, %v764
    %v783 = vmul.f32 %v769, %v769
    %v784 = vmul.f32 %v774, %v774
    %v785 = vmul.f32 %v779, %v779
    %v786 = vsel %vm218, %v782, 0.0
    %787 = vadd.xlane.f32.xlu0 %v786
    %v788 = vpop.xlane.xlu0 %787
    %v789 = vsel %vm218, %v783, 0.0
    %790 = vadd.xlane.f32.xlu0 %v789
    %v791 = vpop.xlane.xlu0 %790
    %v792 = vsel %vm218, %v784, 0.0
    %793 = vadd.xlane.f32.xlu0 %v792
    %v794 = vpop.xlane.xlu0 %793
    %v795 = vsel %vm218, %v785, 0.0
    %796 = vadd.xlane.f32.xlu0 %v795
    %v797 = vpop.xlane.xlu0 %796
    %v798 = vrsqrt.pop %v788
    %v799 = vmul.f32 %v788, %v798
    %vm800 = vcmp.eq.f32.partialorder %v788, inf
    %v801 = vsel %vm800, %v788, %v799
    %vm802 = vcmp.eq.f32.partialorder %v788, 0.0
    %v803 = vand.u32 %v788, 2147483648
    %v804 = vsel %vm802, %v803, %v801
    %v805 = vrsqrt.pop %v791
    %v806 = vmul.f32 %v791, %v805
    %vm807 = vcmp.eq.f32.partialorder %v791, inf
    %v808 = vsel %vm807, %v791, %v806
    %vm809 = vcmp.eq.f32.partialorder %v791, 0.0
    %v810 = vand.u32 %v791, 2147483648
    %v811 = vsel %vm809, %v810, %v808
    %v812 = vrsqrt.pop %v794
    %v813 = vmul.f32 %v794, %v812
    %vm814 = vcmp.eq.f32.partialorder %v794, inf
    %v815 = vsel %vm814, %v794, %v813
    %vm816 = vcmp.eq.f32.partialorder %v794, 0.0
    %v817 = vand.u32 %v794, 2147483648
    %v818 = vsel %vm816, %v817, %v815
    %v819 = vrsqrt.pop %v797
    %v820 = vmul.f32 %v797, %v819
    %vm821 = vcmp.eq.f32.partialorder %v797, inf
    %v822 = vsel %vm821, %v797, %v820
    %vm823 = vcmp.eq.f32.partialorder %v797, 0.0
    %v824 = vand.u32 %v797, 2147483648
    %v825 = vsel %vm823, %v824, %v822
    %v826 = vmax.f32 %v804, 1e-12
    %v827 = vmax.f32 %v811, 1e-12
    %v828 = vmax.f32 %v818, 1e-12
    %v829 = vmax.f32 %v825, 1e-12
    %v830 = vrcp.pop %v826
    %v831 = vmul.f32 %v764, %v830
    %v832 = vrcp.pop %v827
    %v833 = vmul.f32 %v769, %v832
    %v834 = vrcp.pop %v828
    %v835 = vmul.f32 %v774, %v834
    %v836 = vrcp.pop %v829
    %v837 = vmul.f32 %v779, %v836
    %v838 = vmul.f32 %v831, %v528
    %v839 = vmul.f32 %v833, %v528
    %v840 = vmul.f32 %v835, %v528
    %v841 = vmul.f32 %v837, %v528
    %s842 = scalar_lea.vmem %s2, 192
    %v843 = vld [vmem:[%s842] sm:$0xff]
    %v844 = vld [vmem:[%s842 + $0x8] sm:$0xff]
    %v845 = vld [vmem:[%s842 + $0x10] sm:$0xff]
    %v846 = vld [vmem:[%s842 + $0x18] sm:$0xff]
    %v847 = vld [vmem:[%s842 + $0x20] sm:$0xff]
    %v848 = vld [vmem:[%s842 + $0x28] sm:$0xff]
    %v849 = vld [vmem:[%s842 + $0x30] sm:$0xff]
    %v850 = vld [vmem:[%s842 + $0x38] sm:$0xff]
    %851 = vmatprep.subr.mxu0 0.0
    %852 = vmatpush1.msra.mxu0 %v843
    %853 = vmatprep.subr.mxu0 0.0
    %854 = vmatpush1.msra.mxu0 %v844
    %855 = vmatprep.subr.mxu0 0.0
    %856 = vmatpush1.msra.mxu0 %v845
    %857 = vmatprep.subr.mxu0 0.0
    %858 = vmatpush1.msra.mxu0 %v846
    %859 = vmatprep.subr.mxu0 0.0
    %860 = vmatpush1.msra.mxu0 %v847
    %861 = vmatprep.subr.mxu0 0.0
    %862 = vmatpush1.msra.mxu0 %v848
    %863 = vmatprep.subr.mxu0 0.0
    %864 = vmatpush1.msra.mxu0 %v849
    %865 = vmatprep.subr.mxu0 0.0
    %866 = vmatpush1.msra.mxu0 %v850
    %867 = vmatprep.subr.mxu0 0.0
    %868 = vmatpush1.msra.mxu0 0.0
    %869 = vmatprep.subr.mxu0 0.0
    %870 = vmatpush1.msra.mxu0 0.0
    %871 = vmatprep.subr.mxu0 0.0
    %872 = vmatpush1.msra.mxu0 0.0
    %873 = vmatprep.subr.mxu0 0.0
    %874 = vmatpush1.msra.mxu0 0.0
    %875 = vmatprep.subr.mxu0 0.0
    %876 = vmatpush1.msra.mxu0 0.0
    %877 = vmatprep.subr.mxu0 0.0
    %878 = vmatpush1.msra.mxu0 0.0
    %879 = vmatprep.subr.mxu0 0.0
    %880 = vmatpush1.msra.mxu0 0.0
    %881 = vmatprep.subr.mxu0 0.0
    %882 = vmatpush1.msra.mxu0 0.0
    %883 = vmatprep.subr.mxu0 0.0
    %884 = vmatpush1.msra.mxu0 0.0
    %885 = vmatprep.subr.mxu0 0.0
    %886 = vmatpush1.msra.mxu0 0.0
    %887 = vmatprep.subr.mxu0 0.0
    %888 = vmatpush1.msra.mxu0 0.0
    %889 = vmatprep.subr.mxu0 0.0
    %890 = vmatpush1.msra.mxu0 0.0
    %891 = vmatprep.subr.mxu0 0.0
    %892 = vmatpush1.msra.mxu0 0.0
    %893 = vmatprep.subr.mxu0 0.0
    %894 = vmatpush1.msra.mxu0 0.0
    %895 = vmatprep.subr.mxu0 0.0
    %896 = vmatpush1.msra.mxu0 0.0
    %897 = vmatprep.subr.mxu0 0.0
    %898 = vmatpush1.msra.mxu0 0.0
    %899 = vmatprep.subr.mxu0 0.0
    %900 = vmatpush1.msra.mxu0 0.0
    %901 = vmatprep.subr.mxu0 0.0
    %902 = vmatpush1.msra.mxu0 0.0
    %903 = vmatprep.subr.mxu0 0.0
    %904 = vmatpush1.msra.mxu0 0.0
    %905 = vmatprep.subr.mxu0 0.0
    %906 = vmatpush1.msra.mxu0 0.0
    %907 = vmatprep.subr.mxu0 0.0
    %908 = vmatpush1.msra.mxu0 0.0
    %909 = vmatprep.subr.mxu0 0.0
    %910 = vmatpush1.msra.mxu0 0.0
    %911 = vmatprep.subr.mxu0 0.0
    %912 = vmatpush1.msra.mxu0 0.0
    %913 = vmatprep.subr.mxu0 0.0
    %914 = vmatpush1.msra.mxu0 0.0
    %915 = vmatprep.mubr.f32.mxu0 0.0
    %916 = vmatmul.mubr.f32.gmra.mrb[0].mxu0 %v118
    %v917 = vpop.f32.mrb[0].mxu0
    %v918 = vadd.f32 0.0, %v917
    %v919 = vpop.f32.mrb[0].mxu0
    %920 = vmatprep.mubr.f32.mxu0 0.0
    %921 = vmatmul.mubr.f32.gmra.mrb[0].mxu0 %v121
    %v922 = vpop.f32.mrb[0].mxu0
    %v923 = vadd.f32 0.0, %v922
    %v924 = vpop.f32.mrb[0].mxu0
    %925 = vmatprep.mubr.f32.mxu0 0.0
    %926 = vmatmul.mubr.f32.gmra.mrb[0].mxu0 %v124
    %v927 = vpop.f32.mrb[0].mxu0
    %v928 = vadd.f32 0.0, %v927
    %v929 = vpop.f32.mrb[0].mxu0
    %930 = vmatprep.mubr.f32.mxu0 0.0
    %931 = vmatmul.mubr.f32.gmra.mrb[0].mxu0 %v127
    %v932 = vpop.f32.mrb[0].mxu0
    %v933 = vadd.f32 0.0, %v932
    %v934 = vpop.f32.mrb[0].mxu0
    %935 = vdwg.mxu0
    %v936 = vmul.f32 %v918, %v918
    %v937 = vmul.f32 %v923, %v923
    %v938 = vmul.f32 %v928, %v928
    %v939 = vmul.f32 %v933, %v933
    %v940 = vsel %vm218, %v936, 0.0
    %941 = vadd.xlane.f32.xlu0 %v940
    %v942 = vpop.xlane.xlu0 %941
    %v943 = vsel %vm218, %v937, 0.0
    %944 = vadd.xlane.f32.xlu0 %v943
    %v945 = vpop.xlane.xlu0 %944
    %v946 = vsel %vm218, %v938, 0.0
    %947 = vadd.xlane.f32.xlu0 %v946
    %v948 = vpop.xlane.xlu0 %947
    %v949 = vsel %vm218, %v939, 0.0
    %950 = vadd.xlane.f32.xlu0 %v949
    %v951 = vpop.xlane.xlu0 %950
    %v952 = vrsqrt.pop %v942
    %v953 = vmul.f32 %v942, %v952
    %vm954 = vcmp.eq.f32.partialorder %v942, inf
    %v955 = vsel %vm954, %v942, %v953
    %vm956 = vcmp.eq.f32.partialorder %v942, 0.0
    %v957 = vand.u32 %v942, 2147483648
    %v958 = vsel %vm956, %v957, %v955
    %v959 = vrsqrt.pop %v945
    %v960 = vmul.f32 %v945, %v959
    %vm961 = vcmp.eq.f32.partialorder %v945, inf
    %v962 = vsel %vm961, %v945, %v960
    %vm963 = vcmp.eq.f32.partialorder %v945, 0.0
    %v964 = vand.u32 %v945, 2147483648
    %v965 = vsel %vm963, %v964, %v962
    %v966 = vrsqrt.pop %v948
    %v967 = vmul.f32 %v948, %v966
    %vm968 = vcmp.eq.f32.partialorder %v948, inf
    %v969 = vsel %vm968, %v948, %v967
    %vm970 = vcmp.eq.f32.partialorder %v948, 0.0
    %v971 = vand.u32 %v948, 2147483648
    %v972 = vsel %vm970, %v971, %v969
    %v973 = vrsqrt.pop %v951
    %v974 = vmul.f32 %v951, %v973
    %vm975 = vcmp.eq.f32.partialorder %v951, inf
    %v976 = vsel %vm975, %v951, %v974
    %vm977 = vcmp.eq.f32.partialorder %v951, 0.0
    %v978 = vand.u32 %v951, 2147483648
    %v979 = vsel %vm977, %v978, %v976
    %v980 = vmax.f32 %v958, 1e-12
    %v981 = vmax.f32 %v965, 1e-12
    %v982 = vmax.f32 %v972, 1e-12
    %v983 = vmax.f32 %v979, 1e-12
    %v984 = vrcp.pop %v980
    %v985 = vmul.f32 %v918, %v984
    %v986 = vrcp.pop %v981
    %v987 = vmul.f32 %v923, %v986
    %v988 = vrcp.pop %v982
    %v989 = vmul.f32 %v928, %v988
    %v990 = vrcp.pop %v983
    %v991 = vmul.f32 %v933, %v990
    %v992 = vmul.f32 %v985, %v528
    %v993 = vmul.f32 %v987, %v528
    %v994 = vmul.f32 %v989, %v528
    %v995 = vmul.f32 %v991, %v528
    %v996 = vld [vmem:[%s5] sm:$0x1]
    %v997 = vld [vmem:[%s6] sm:$0x1]
    %v999 = vsel %vm218, %v530, 0
    %v1002 = vsel %vm218, %v531, 0
    %v1005 = vsel %vm218, %v684, 0
    %v1008 = vsel %vm218, %v685, 0
    %v1011 = vsel %vm218, %v838, 0
    %v1014 = vsel %vm218, %v839, 0
    %v1017 = vsel %vm218, %v992, 0
    %v1020 = vsel %vm218, %v993, 0
    %v1023 = vsel %vm218, %v277, 0
    %v1026 = vsel %vm218, %v278, 0
    %1028 = vmatprep.subr.mxu0 0.0
    %1029 = vmatpush1.xpose.msra.mxu0 %v1023
    %1030 = vmatprep.subr.mxu0 0.0
    %1031 = vmatpush1.xpose.msra.mxu0 %v1026
    %1032 = vmatprep.subr.mxu0 0.0
    %1033 = vmatpush1.xpose.msra.mxu0 0.0
    %1034 = vmatprep.subr.mxu0 0.0
    %1035 = vmatpush1.xpose.msra.mxu0 0.0
    %1036 = vmatprep.subr.mxu0 0.0
    %1037 = vmatpush1.xpose.msra.mxu0 0.0
    %1038 = vmatprep.subr.mxu0 0.0
    %1039 = vmatpush1.xpose.msra.mxu0 0.0
    %1040 = vmatprep.subr.mxu0 0.0
    %1041 = vmatpush1.xpose.msra.mxu0 0.0
    %1042 = vmatprep.subr.mxu0 0.0
    %1043 = vmatpush1.xpose.msra.mxu0 0.0
    %1044 = vmatprep.subr.mxu0 0.0
    %1045 = vmatpush1.xpose.msra.mxu0 0.0
    %1046 = vmatprep.subr.mxu0 0.0
    %1047 = vmatpush1.xpose.msra.mxu0 0.0
    %1048 = vmatprep.subr.mxu0 0.0
    %1049 = vmatpush1.xpose.msra.mxu0 0.0
    %1050 = vmatprep.subr.mxu0 0.0
    %1051 = vmatpush1.xpose.msra.mxu0 0.0
    %1052 = vmatprep.subr.mxu0 0.0
    %1053 = vmatpush1.xpose.msra.mxu0 0.0
    %1054 = vmatprep.subr.mxu0 0.0
    %1055 = vmatpush1.xpose.msra.mxu0 0.0
    %1056 = vmatprep.subr.mxu0 0.0
    %1057 = vmatpush1.xpose.msra.mxu0 0.0
    %1058 = vmatprep.subr.mxu0 0.0
    %1059 = vmatpush1.xpose.msra.mxu0 0.0
    %1060 = vmatprep.subr.mxu0 0.0
    %1061 = vmatpush1.xpose.msra.mxu0 0.0
    %1062 = vmatprep.subr.mxu0 0.0
    %1063 = vmatpush1.xpose.msra.mxu0 0.0
    %1064 = vmatprep.subr.mxu0 0.0
    %1065 = vmatpush1.xpose.msra.mxu0 0.0
    %1066 = vmatprep.subr.mxu0 0.0
    %1067 = vmatpush1.xpose.msra.mxu0 0.0
    %1068 = vmatprep.subr.mxu0 0.0
    %1069 = vmatpush1.xpose.msra.mxu0 0.0
    %1070 = vmatprep.subr.mxu0 0.0
    %1071 = vmatpush1.xpose.msra.mxu0 0.0
    %1072 = vmatprep.subr.mxu0 0.0
    %1073 = vmatpush1.xpose.msra.mxu0 0.0
    %1074 = vmatprep.subr.mxu0 0.0
    %1075 = vmatpush1.xpose.msra.mxu0 0.0
    %1076 = vmatprep.subr.mxu0 0.0
    %1077 = vmatpush1.xpose.msra.mxu0 0.0
    %1078 = vmatprep.subr.mxu0 0.0
    %1079 = vmatpush1.xpose.msra.mxu0 0.0
    %1080 = vmatprep.subr.mxu0 0.0
    %1081 = vmatpush1.xpose.msra.mxu0 0.0
    %1082 = vmatprep.subr.mxu0 0.0
    %1083 = vmatpush1.xpose.msra.mxu0 0.0
    %1084 = vmatprep.subr.mxu0 0.0
    %1085 = vmatpush1.xpose.msra.mxu0 0.0
    %1086 = vmatprep.subr.mxu0 0.0
    %1087 = vmatpush1.xpose.msra.mxu0 0.0
    %1088 = vmatprep.subr.mxu0 0.0
    %1089 = vmatpush1.xpose.msra.mxu0 0.0
    %1090 = vmatprep.subr.mxu0 0.0
    %1091 = vmatpush1.xpose.msra.mxu0 0.0
    %1092 = vmatprep.mubr.f32.mxu0 0.0
    %1093 = vmatmul.mubr.f32.gmra.mrb[0].mxu0 %v999
    %v1094 = vpop.f32.mrb[0].mxu0
    %v1095 = vadd.f32 0.0, %v1094
    %v1096 = vpop.f32.mrb[0].mxu0
    %1097 = vmatprep.mubr.f32.mxu0 0.0
    %1098 = vmatmul.mubr.f32.gmra.mrb[0].mxu0 %v1002
    %v1099 = vpop.f32.mrb[0].mxu0
    %v1100 = vadd.f32 0.0, %v1099
    %v1101 = vpop.f32.mrb[0].mxu0
    %1102 = vmatprep.mubr.f32.mxu0 0.0
    %1103 = vmatmul.mubr.f32.gmra.mrb[0].mxu0 %v1005
    %v1104 = vpop.f32.mrb[0].mxu0
    %v1105 = vadd.f32 0.0, %v1104
    %v1106 = vpop.f32.mrb[0].mxu0
    %1107 = vmatprep.mubr.f32.mxu0 0.0
    %1108 = vmatmul.mubr.f32.gmra.mrb[0].mxu0 %v1008
    %v1109 = vpop.f32.mrb[0].mxu0
    %v1110 = vadd.f32 0.0, %v1109
    %v1111 = vpop.f32.mrb[0].mxu0
    %1112 = vmatprep.mubr.f32.mxu0 0.0
    %1113 = vmatmul.mubr.f32.gmra.mrb[0].mxu0 %v1011
    %v1114 = vpop.f32.mrb[0].mxu0
    %v1115 = vadd.f32 0.0, %v1114
    %v1116 = vpop.f32.mrb[0].mxu0
    %1117 = vmatprep.mubr.f32.mxu0 0.0
    %1118 = vmatmul.mubr.f32.gmra.mrb[0].mxu0 %v1014
    %v1119 = vpop.f32.mrb[0].mxu0
    %v1120 = vadd.f32 0.0, %v1119
    %v1121 = vpop.f32.mrb[0].mxu0
    %1122 = vmatprep.mubr.f32.mxu0 0.0
    %1123 = vmatmul.mubr.f32.gmra.mrb[0].mxu0 %v1017
    %v1124 = vpop.f32.mrb[0].mxu0
    %v1125 = vadd.f32 0.0, %v1124
    %v1126 = vpop.f32.mrb[0].mxu0
    %1127 = vmatprep.mubr.f32.mxu0 0.0
    %1128 = vmatmul.mubr.f32.gmra.mrb[0].mxu0 %v1020
    %v1129 = vpop.f32.mrb[0].mxu0
    %v1130 = vadd.f32 0.0, %v1129
    %v1131 = vpop.f32.mrb[0].mxu0
    %1132 = vdwg.mxu0
    %v1134 = vlaneseq
    %v1135 = vshrl.u32 %v1134, 7
    %v1136 = vsub.s32 0, %v1135
    %v1137 = vrot.slane %v996, %v1136
    %v1139 = vmul.f32 %v530, %v1137
    %v1140 = vmul.f32 %v531, %v1137
    %v1141 = vmul.f32 %v684, %v1137
    %v1142 = vmul.f32 %v685, %v1137
    %v1143 = vmul.f32 %v838, %v1137
    %v1144 = vmul.f32 %v839, %v1137
    %v1145 = vmul.f32 %v992, %v1137
    %v1146 = vmul.f32 %v993, %v1137
    %v1147 = vsel %vm218, %v1139, 0.0
    %1148 = vadd.xlane.f32.xlu0 %v1147
    %v1149 = vpop.xlane.xlu0 %1148
    %v1150 = vsel %vm218, %v1140, 0.0
    %1151 = vadd.xlane.f32.xlu0 %v1150
    %v1152 = vpop.xlane.xlu0 %1151
    %v1153 = vsel %vm218, %v1141, 0.0
    %1154 = vadd.xlane.f32.xlu0 %v1153
    %v1155 = vpop.xlane.xlu0 %1154
    %v1156 = vsel %vm218, %v1142, 0.0
    %1157 = vadd.xlane.f32.xlu0 %v1156
    %v1158 = vpop.xlane.xlu0 %1157
    %v1159 = vsel %vm218, %v1143, 0.0
    %1160 = vadd.xlane.f32.xlu0 %v1159
    %v1161 = vpop.xlane.xlu0 %1160
    %v1162 = vsel %vm218, %v1144, 0.0
    %1163 = vadd.xlane.f32.xlu0 %v1162
    %v1164 = vpop.xlane.xlu0 %1163
    %v1165 = vsel %vm218, %v1145, 0.0
    %1166 = vadd.xlane.f32.xlu0 %v1165
    %v1167 = vpop.xlane.xlu0 %1166
    %v1168 = vsel %vm218, %v1146, 0.0
    %1169 = vadd.xlane.f32.xlu0 %v1168
    %v1170 = vpop.xlane.xlu0 %1169
    %vm1171 = vcmask 130048
    %v1172 = vsel %vm1171, %v1095, -inf
    %1173 = vmax.xlane.f32.xlu0 %v1172
    %v1174 = vpop.xlane.xlu0 %1173
    %v1175 = vsel %vm1171, %v1100, -inf
    %1176 = vmax.xlane.f32.xlu0 %v1175
    %v1177 = vpop.xlane.xlu0 %1176
    %v1178 = vsel %vm1171, %v1105, -inf
    %1179 = vmax.xlane.f32.xlu0 %v1178
    %v1180 = vpop.xlane.xlu0 %1179
    %v1181 = vsel %vm1171, %v1110, -inf
    %1182 = vmax.xlane.f32.xlu0 %v1181
    %v1183 = vpop.xlane.xlu0 %1182
    %v1184 = vsel %vm1171, %v1115, -inf
    %1185 = vmax.xlane.f32.xlu0 %v1184
    %v1186 = vpop.xlane.xlu0 %1185
    %v1187 = vsel %vm1171, %v1120, -inf
    %1188 = vmax.xlane.f32.xlu0 %v1187
    %v1189 = vpop.xlane.xlu0 %1188
    %v1190 = vsel %vm1171, %v1125, -inf
    %1191 = vmax.xlane.f32.xlu0 %v1190
    %v1192 = vpop.xlane.xlu0 %1191
    %v1193 = vsel %vm1171, %v1130, -inf
    %1194 = vmax.xlane.f32.xlu0 %v1193
    %v1195 = vpop.xlane.xlu0 %1194
    %v1196 = vmax.f32 %v1174, %v1149
    %v1197 = vmax.f32 %v1177, %v1152
    %v1198 = vmax.f32 %v1180, %v1155
    %v1199 = vmax.f32 %v1183, %v1158
    %v1200 = vmax.f32 %v1186, %v1161
    %v1201 = vmax.f32 %v1189, %v1164
    %v1202 = vmax.f32 %v1192, %v1167
    %v1203 = vmax.f32 %v1195, %v1170
    %v1204 = vsub.f32 %v1095, %v1196
    %v1205 = vsub.f32 %v1100, %v1197
    %v1206 = vsub.f32 %v1105, %v1198
    %v1207 = vsub.f32 %v1110, %v1199
    %v1208 = vsub.f32 %v1115, %v1200
    %v1209 = vsub.f32 %v1120, %v1201
    %v1210 = vsub.f32 %v1125, %v1202
    %v1211 = vsub.f32 %v1130, %v1203
    %v1212 = vmul.f32 %v1204, 1.442695
    %v1213 = vpow.pop %v1212
    %v1214 = vmul.f32 %v1205, 1.442695
    %v1215 = vpow.pop %v1214
    %v1216 = vmul.f32 %v1206, 1.442695
    %v1217 = vpow.pop %v1216
    %v1218 = vmul.f32 %v1207, 1.442695
    %v1219 = vpow.pop %v1218
    %v1220 = vmul.f32 %v1208, 1.442695
    %v1221 = vpow.pop %v1220
    %v1222 = vmul.f32 %v1209, 1.442695
    %v1223 = vpow.pop %v1222
    %v1224 = vmul.f32 %v1210, 1.442695
    %v1225 = vpow.pop %v1224
    %v1226 = vmul.f32 %v1211, 1.442695
    %v1227 = vpow.pop %v1226
    %v1228 = vsub.f32 %v1149, %v1196
    %v1229 = vsub.f32 %v1152, %v1197
    %v1230 = vsub.f32 %v1155, %v1198
    %v1231 = vsub.f32 %v1158, %v1199
    %v1232 = vsub.f32 %v1161, %v1200
    %v1233 = vsub.f32 %v1164, %v1201
    %v1234 = vsub.f32 %v1167, %v1202
    %v1235 = vsub.f32 %v1170, %v1203
    %v1236 = vmul.f32 %v1228, 1.442695
    %v1237 = vpow.pop %v1236
    %v1238 = vmul.f32 %v1229, 1.442695
    %v1239 = vpow.pop %v1238
    %v1240 = vmul.f32 %v1230, 1.442695
    %v1241 = vpow.pop %v1240
    %v1242 = vmul.f32 %v1231, 1.442695
    %v1243 = vpow.pop %v1242
    %v1244 = vmul.f32 %v1232, 1.442695
    %v1245 = vpow.pop %v1244
    %v1246 = vmul.f32 %v1233, 1.442695
    %v1247 = vpow.pop %v1246
    %v1248 = vmul.f32 %v1234, 1.442695
    %v1249 = vpow.pop %v1248
    %v1250 = vmul.f32 %v1235, 1.442695
    %v1251 = vpow.pop %v1250
    %v1252 = vsel %vm1171, %v1213, 0.0
    %1253 = vadd.xlane.f32.xlu0 %v1252
    %v1254 = vpop.xlane.xlu0 %1253
    %v1255 = vsel %vm1171, %v1215, 0.0
    %1256 = vadd.xlane.f32.xlu0 %v1255
    %v1257 = vpop.xlane.xlu0 %1256
    %v1258 = vsel %vm1171, %v1217, 0.0
    %1259 = vadd.xlane.f32.xlu0 %v1258
    %v1260 = vpop.xlane.xlu0 %1259
    %v1261 = vsel %vm1171, %v1219, 0.0
    %1262 = vadd.xlane.f32.xlu0 %v1261
    %v1263 = vpop.xlane.xlu0 %1262
    %v1264 = vsel %vm1171, %v1221, 0.0
    %1265 = vadd.xlane.f32.xlu0 %v1264
    %v1266 = vpop.xlane.xlu0 %1265
    %v1267 = vsel %vm1171, %v1223, 0.0
    %1268 = vadd.xlane.f32.xlu0 %v1267
    %v1269 = vpop.xlane.xlu0 %1268
    %v1270 = vsel %vm1171, %v1225, 0.0
    %1271 = vadd.xlane.f32.xlu0 %v1270
    %v1272 = vpop.xlane.xlu0 %1271
    %v1273 = vsel %vm1171, %v1227, 0.0
    %1274 = vadd.xlane.f32.xlu0 %v1273
    %v1275 = vpop.xlane.xlu0 %1274
    %v1276 = vadd.f32 %v1254, %v1237
    %v1277 = vadd.f32 %v1257, %v1239
    %v1278 = vadd.f32 %v1260, %v1241
    %v1279 = vadd.f32 %v1263, %v1243
    %v1280 = vadd.f32 %v1266, %v1245
    %v1281 = vadd.f32 %v1269, %v1247
    %v1282 = vadd.f32 %v1272, %v1249
    %v1283 = vadd.f32 %v1275, %v1251
    %v1284 = vrcp.pop %v1276
    %v1285 = vrcp.pop %v1277
    %v1286 = vrcp.pop %v1278
    %v1287 = vrcp.pop %v1279
    %v1288 = vrcp.pop %v1280
    %v1289 = vrcp.pop %v1281
    %v1290 = vrcp.pop %v1282
    %v1291 = vrcp.pop %v1283
    %v1293 = vlaneseq
    %v1294 = vshrl.u32 %v1293, 7
    %v1295 = vsub.s32 0, %v1294
    %v1296 = vrot.slane %v997, %v1295
    %v1298 = vmul.f32 %v1237, %v1296
    %v1299 = vmul.f32 %v1239, %v1296
    %v1300 = vmul.f32 %v1241, %v1296
    %v1301 = vmul.f32 %v1243, %v1296
    %v1302 = vmul.f32 %v1245, %v1296
    %v1303 = vmul.f32 %v1247, %v1296
    %v1304 = vmul.f32 %v1249, %v1296
    %v1305 = vmul.f32 %v1251, %v1296
    %v1307 = vsel %vm1171, %v1213, 0
    %v1310 = vsel %vm1171, %v1215, 0
    %v1313 = vsel %vm1171, %v1217, 0
    %v1316 = vsel %vm1171, %v1219, 0
    %v1319 = vsel %vm1171, %v1221, 0
    %v1322 = vsel %vm1171, %v1223, 0
    %v1325 = vsel %vm1171, %v1225, 0
    %v1328 = vsel %vm1171, %v1227, 0
    %1330 = vmatprep.subr.mxu0 0.0
    %1331 = vmatpush1.msra.mxu0 %v356
    %1332 = vmatprep.subr.mxu0 0.0
    %1333 = vmatpush1.msra.mxu0 %v361
    %1334 = vmatprep.subr.mxu0 0.0
    %1335 = vmatpush1.msra.mxu0 0.0
    %1336 = vmatprep.subr.mxu0 0.0
    %1337 = vmatpush1.msra.mxu0 0.0
    %1338 = vmatprep.subr.mxu0 0.0
    %1339 = vmatpush1.msra.mxu0 0.0
    %1340 = vmatprep.subr.mxu0 0.0
    %1341 = vmatpush1.msra.mxu0 0.0
    %1342 = vmatprep.subr.mxu0 0.0
    %1343 = vmatpush1.msra.mxu0 0.0
    %1344 = vmatprep.subr.mxu0 0.0
    %1345 = vmatpush1.msra.mxu0 0.0
    %1346 = vmatprep.subr.mxu0 0.0
    %1347 = vmatpush1.msra.mxu0 0.0
    %1348 = vmatprep.subr.mxu0 0.0
    %1349 = vmatpush1.msra.mxu0 0.0
    %1350 = vmatprep.subr.mxu0 0.0
    %1351 = vmatpush1.msra.mxu0 0.0
    %1352 = vmatprep.subr.mxu0 0.0
    %1353 = vmatpush1.msra.mxu0 0.0
    %1354 = vmatprep.subr.mxu0 0.0
    %1355 = vmatpush1.msra.mxu0 0.0
    %1356 = vmatprep.subr.mxu0 0.0
    %1357 = vmatpush1.msra.mxu0 0.0
    %1358 = vmatprep.subr.mxu0 0.0
    %1359 = vmatpush1.msra.mxu0 0.0
    %1360 = vmatprep.subr.mxu0 0.0
    %1361 = vmatpush1.msra.mxu0 0.0
    %1362 = vmatprep.subr.mxu0 0.0
    %1363 = vmatpush1.msra.mxu0 0.0
    %1364 = vmatprep.subr.mxu0 0.0
    %1365 = vmatpush1.msra.mxu0 0.0
    %1366 = vmatprep.subr.mxu0 0.0
    %1367 = vmatpush1.msra.mxu0 0.0
    %1368 = vmatprep.subr.mxu0 0.0
    %1369 = vmatpush1.msra.mxu0 0.0
    %1370 = vmatprep.subr.mxu0 0.0
    %1371 = vmatpush1.msra.mxu0 0.0
    %1372 = vmatprep.subr.mxu0 0.0
    %1373 = vmatpush1.msra.mxu0 0.0
    %1374 = vmatprep.subr.mxu0 0.0
    %1375 = vmatpush1.msra.mxu0 0.0
    %1376 = vmatprep.subr.mxu0 0.0
    %1377 = vmatpush1.msra.mxu0 0.0
    %1378 = vmatprep.subr.mxu0 0.0
    %1379 = vmatpush1.msra.mxu0 0.0
    %1380 = vmatprep.subr.mxu0 0.0
    %1381 = vmatpush1.msra.mxu0 0.0
    %1382 = vmatprep.subr.mxu0 0.0
    %1383 = vmatpush1.msra.mxu0 0.0
    %1384 = vmatprep.subr.mxu0 0.0
    %1385 = vmatpush1.msra.mxu0 0.0
    %1386 = vmatprep.subr.mxu0 0.0
    %1387 = vmatpush1.msra.mxu0 0.0
    %1388 = vmatprep.subr.mxu0 0.0
    %1389 = vmatpush1.msra.mxu0 0.0
    %1390 = vmatprep.subr.mxu0 0.0
    %1391 = vmatpush1.msra.mxu0 0.0
    %1392 = vmatprep.subr.mxu0 0.0
    %1393 = vmatpush1.msra.mxu0 0.0
    %1394 = vmatprep.mubr.f32.mxu0 0.0
    %1395 = vmatmul.mubr.f32.gmra.mrb[0].mxu0 %v1307
    %v1396 = vpop.f32.mrb[0].mxu0
    %v1397 = vadd.f32 %v1298, %v1396
    %v1398 = vpop.f32.mrb[0].mxu0
    %1399 = vmatprep.mubr.f32.mxu0 0.0
    %1400 = vmatmul.mubr.f32.gmra.mrb[0].mxu0 %v1310
    %v1401 = vpop.f32.mrb[0].mxu0
    %v1402 = vadd.f32 %v1299, %v1401
    %v1403 = vpop.f32.mrb[0].mxu0
    %1404 = vmatprep.mubr.f32.mxu0 0.0
    %1405 = vmatmul.mubr.f32.gmra.mrb[0].mxu0 %v1313
    %v1406 = vpop.f32.mrb[0].mxu0
    %v1407 = vadd.f32 %v1300, %v1406
    %v1408 = vpop.f32.mrb[0].mxu0
    %1409 = vmatprep.mubr.f32.mxu0 0.0
    %1410 = vmatmul.mubr.f32.gmra.mrb[0].mxu0 %v1316
    %v1411 = vpop.f32.mrb[0].mxu0
    %v1412 = vadd.f32 %v1301, %v1411
    %v1413 = vpop.f32.mrb[0].mxu0
    %1414 = vmatprep.mubr.f32.mxu0 0.0
    %1415 = vmatmul.mubr.f32.gmra.mrb[0].mxu0 %v1319
    %v1416 = vpop.f32.mrb[0].mxu0
    %v1417 = vadd.f32 %v1302, %v1416
    %v1418 = vpop.f32.mrb[0].mxu0
    %1419 = vmatprep.mubr.f32.mxu0 0.0
    %1420 = vmatmul.mubr.f32.gmra.mrb[0].mxu0 %v1322
    %v1421 = vpop.f32.mrb[0].mxu0
    %v1422 = vadd.f32 %v1303, %v1421
    %v1423 = vpop.f32.mrb[0].mxu0
    %1424 = vmatprep.mubr.f32.mxu0 0.0
    %1425 = vmatmul.mubr.f32.gmra.mrb[0].mxu0 %v1325
    %v1426 = vpop.f32.mrb[0].mxu0
    %v1427 = vadd.f32 %v1304, %v1426
    %v1428 = vpop.f32.mrb[0].mxu0
    %1429 = vmatprep.mubr.f32.mxu0 0.0
    %1430 = vmatmul.mubr.f32.gmra.mrb[0].mxu0 %v1328
    %v1431 = vpop.f32.mrb[0].mxu0
    %v1432 = vadd.f32 %v1305, %v1431
    %v1433 = vpop.f32.mrb[0].mxu0
    %1434 = vdwg.mxu0
    %v1435 = vmul.f32 %v1397, %v1284
    %v1436 = vmul.f32 %v1402, %v1285
    %v1437 = vmul.f32 %v1407, %v1286
    %v1438 = vmul.f32 %v1412, %v1287
    %v1439 = vmul.f32 %v1417, %v1288
    %v1440 = vmul.f32 %v1422, %v1289
    %v1441 = vmul.f32 %v1427, %v1290
    %v1442 = vmul.f32 %v1432, %v1291
    %v1444 = vsel %vm218, %v532, 0
    %v1447 = vsel %vm218, %v533, 0
    %v1450 = vsel %vm218, %v686, 0
    %v1453 = vsel %vm218, %v687, 0
    %v1456 = vsel %vm218, %v840, 0
    %v1459 = vsel %vm218, %v841, 0
    %v1462 = vsel %vm218, %v994, 0
    %v1465 = vsel %vm218, %v995, 0
    %v1468 = vsel %vm218, %v279, 0
    %v1471 = vsel %vm218, %v280, 0
    %1473 = vmatprep.subr.mxu0 0.0
    %1474 = vmatpush1.xpose.msra.mxu0 %v1468
    %1475 = vmatprep.subr.mxu0 0.0
    %1476 = vmatpush1.xpose.msra.mxu0 %v1471
    %1477 = vmatprep.subr.mxu0 0.0
    %1478 = vmatpush1.xpose.msra.mxu0 0.0
    %1479 = vmatprep.subr.mxu0 0.0
    %1480 = vmatpush1.xpose.msra.mxu0 0.0
    %1481 = vmatprep.subr.mxu0 0.0
    %1482 = vmatpush1.xpose.msra.mxu0 0.0
    %1483 = vmatprep.subr.mxu0 0.0
    %1484 = vmatpush1.xpose.msra.mxu0 0.0
    %1485 = vmatprep.subr.mxu0 0.0
    %1486 = vmatpush1.xpose.msra.mxu0 0.0
    %1487 = vmatprep.subr.mxu0 0.0
    %1488 = vmatpush1.xpose.msra.mxu0 0.0
    %1489 = vmatprep.subr.mxu0 0.0
    %1490 = vmatpush1.xpose.msra.mxu0 0.0
    %1491 = vmatprep.subr.mxu0 0.0
    %1492 = vmatpush1.xpose.msra.mxu0 0.0
    %1493 = vmatprep.subr.mxu0 0.0
    %1494 = vmatpush1.xpose.msra.mxu0 0.0
    %1495 = vmatprep.subr.mxu0 0.0
    %1496 = vmatpush1.xpose.msra.mxu0 0.0
    %1497 = vmatprep.subr.mxu0 0.0
    %1498 = vmatpush1.xpose.msra.mxu0 0.0
    %1499 = vmatprep.subr.mxu0 0.0
    %1500 = vmatpush1.xpose.msra.mxu0 0.0
    %1501 = vmatprep.subr.mxu0 0.0
    %1502 = vmatpush1.xpose.msra.mxu0 0.0
    %1503 = vmatprep.subr.mxu0 0.0
    %1504 = vmatpush1.xpose.msra.mxu0 0.0
    %1505 = vmatprep.subr.mxu0 0.0
    %1506 = vmatpush1.xpose.msra.mxu0 0.0
    %1507 = vmatprep.subr.mxu0 0.0
    %1508 = vmatpush1.xpose.msra.mxu0 0.0
    %1509 = vmatprep.subr.mxu0 0.0
    %1510 = vmatpush1.xpose.msra.mxu0 0.0
    %1511 = vmatprep.subr.mxu0 0.0
    %1512 = vmatpush1.xpose.msra.mxu0 0.0
    %1513 = vmatprep.subr.mxu0 0.0
    %1514 = vmatpush1.xpose.msra.mxu0 0.0
    %1515 = vmatprep.subr.mxu0 0.0
    %1516 = vmatpush1.xpose.msra.mxu0 0.0
    %1517 = vmatprep.subr.mxu0 0.0
    %1518 = vmatpush1.xpose.msra.mxu0 0.0
    %1519 = vmatprep.subr.mxu0 0.0
    %1520 = vmatpush1.xpose.msra.mxu0 0.0
    %1521 = vmatprep.subr.mxu0 0.0
    %1522 = vmatpush1.xpose.msra.mxu0 0.0
    %1523 = vmatprep.subr.mxu0 0.0
    %1524 = vmatpush1.xpose.msra.mxu0 0.0
    %1525 = vmatprep.subr.mxu0 0.0
    %1526 = vmatpush1.xpose.msra.mxu0 0.0
    %1527 = vmatprep.subr.mxu0 0.0
    %1528 = vmatpush1.xpose.msra.mxu0 0.0
    %1529 = vmatprep.subr.mxu0 0.0
    %1530 = vmatpush1.xpose.msra.mxu0 0.0
    %1531 = vmatprep.subr.mxu0 0.0
    %1532 = vmatpush1.xpose.msra.mxu0 0.0
    %1533 = vmatprep.subr.mxu0 0.0
    %1534 = vmatpush1.xpose.msra.mxu0 0.0
    %1535 = vmatprep.subr.mxu0 0.0
    %1536 = vmatpush1.xpose.msra.mxu0 0.0
    %1537 = vmatprep.mubr.f32.mxu0 0.0
    %1538 = vmatmul.mubr.f32.gmra.mrb[0].mxu0 %v1444
    %v1539 = vpop.f32.mrb[0].mxu0
    %v1540 = vadd.f32 0.0, %v1539
    %v1541 = vpop.f32.mrb[0].mxu0
    %1542 = vmatprep.mubr.f32.mxu0 0.0
    %1543 = vmatmul.mubr.f32.gmra.mrb[0].mxu0 %v1447
    %v1544 = vpop.f32.mrb[0].mxu0
    %v1545 = vadd.f32 0.0, %v1544
    %v1546 = vpop.f32.mrb[0].mxu0
    %1547 = vmatprep.mubr.f32.mxu0 0.0
    %1548 = vmatmul.mubr.f32.gmra.mrb[0].mxu0 %v1450
    %v1549 = vpop.f32.mrb[0].mxu0
    %v1550 = vadd.f32 0.0, %v1549
    %v1551 = vpop.f32.mrb[0].mxu0
    %1552 = vmatprep.mubr.f32.mxu0 0.0
    %1553 = vmatmul.mubr.f32.gmra.mrb[0].mxu0 %v1453
    %v1554 = vpop.f32.mrb[0].mxu0
    %v1555 = vadd.f32 0.0, %v1554
    %v1556 = vpop.f32.mrb[0].mxu0
    %1557 = vmatprep.mubr.f32.mxu0 0.0
    %1558 = vmatmul.mubr.f32.gmra.mrb[0].mxu0 %v1456
    %v1559 = vpop.f32.mrb[0].mxu0
    %v1560 = vadd.f32 0.0, %v1559
    %v1561 = vpop.f32.mrb[0].mxu0
    %1562 = vmatprep.mubr.f32.mxu0 0.0
    %1563 = vmatmul.mubr.f32.gmra.mrb[0].mxu0 %v1459
    %v1564 = vpop.f32.mrb[0].mxu0
    %v1565 = vadd.f32 0.0, %v1564
    %v1566 = vpop.f32.mrb[0].mxu0
    %1567 = vmatprep.mubr.f32.mxu0 0.0
    %1568 = vmatmul.mubr.f32.gmra.mrb[0].mxu0 %v1462
    %v1569 = vpop.f32.mrb[0].mxu0
    %v1570 = vadd.f32 0.0, %v1569
    %v1571 = vpop.f32.mrb[0].mxu0
    %1572 = vmatprep.mubr.f32.mxu0 0.0
    %1573 = vmatmul.mubr.f32.gmra.mrb[0].mxu0 %v1465
    %v1574 = vpop.f32.mrb[0].mxu0
    %v1575 = vadd.f32 0.0, %v1574
    %v1576 = vpop.f32.mrb[0].mxu0
    %1577 = vdwg.mxu0
    %v1578 = vmul.f32 %v532, %v1137
    %v1579 = vmul.f32 %v533, %v1137
    %v1580 = vmul.f32 %v686, %v1137
    %v1581 = vmul.f32 %v687, %v1137
    %v1582 = vmul.f32 %v840, %v1137
    %v1583 = vmul.f32 %v841, %v1137
    %v1584 = vmul.f32 %v994, %v1137
    %v1585 = vmul.f32 %v995, %v1137
    %v1586 = vsel %vm218, %v1578, 0.0
    %1587 = vadd.xlane.f32.xlu0 %v1586
    %v1588 = vpop.xlane.xlu0 %1587
    %v1589 = vsel %vm218, %v1579, 0.0
    %1590 = vadd.xlane.f32.xlu0 %v1589
    %v1591 = vpop.xlane.xlu0 %1590
    %v1592 = vsel %vm218, %v1580, 0.0
    %1593 = vadd.xlane.f32.xlu0 %v1592
    %v1594 = vpop.xlane.xlu0 %1593
    %v1595 = vsel %vm218, %v1581, 0.0
    %1596 = vadd.xlane.f32.xlu0 %v1595
    %v1597 = vpop.xlane.xlu0 %1596
    %v1598 = vsel %vm218, %v1582, 0.0
    %1599 = vadd.xlane.f32.xlu0 %v1598
    %v1600 = vpop.xlane.xlu0 %1599
    %v1601 = vsel %vm218, %v1583, 0.0
    %1602 = vadd.xlane.f32.xlu0 %v1601
    %v1603 = vpop.xlane.xlu0 %1602
    %v1604 = vsel %vm218, %v1584, 0.0
    %1605 = vadd.xlane.f32.xlu0 %v1604
    %v1606 = vpop.xlane.xlu0 %1605
    %v1607 = vsel %vm218, %v1585, 0.0
    %1608 = vadd.xlane.f32.xlu0 %v1607
    %v1609 = vpop.xlane.xlu0 %1608
    %v1610 = vsel %vm1171, %v1540, -inf
    %1611 = vmax.xlane.f32.xlu0 %v1610
    %v1612 = vpop.xlane.xlu0 %1611
    %v1613 = vsel %vm1171, %v1545, -inf
    %1614 = vmax.xlane.f32.xlu0 %v1613
    %v1615 = vpop.xlane.xlu0 %1614
    %v1616 = vsel %vm1171, %v1550, -inf
    %1617 = vmax.xlane.f32.xlu0 %v1616
    %v1618 = vpop.xlane.xlu0 %1617
    %v1619 = vsel %vm1171, %v1555, -inf
    %1620 = vmax.xlane.f32.xlu0 %v1619
    %v1621 = vpop.xlane.xlu0 %1620
    %v1622 = vsel %vm1171, %v1560, -inf
    %1623 = vmax.xlane.f32.xlu0 %v1622
    %v1624 = vpop.xlane.xlu0 %1623
    %v1625 = vsel %vm1171, %v1565, -inf
    %1626 = vmax.xlane.f32.xlu0 %v1625
    %v1627 = vpop.xlane.xlu0 %1626
    %v1628 = vsel %vm1171, %v1570, -inf
    %1629 = vmax.xlane.f32.xlu0 %v1628
    %v1630 = vpop.xlane.xlu0 %1629
    %v1631 = vsel %vm1171, %v1575, -inf
    %1632 = vmax.xlane.f32.xlu0 %v1631
    %v1633 = vpop.xlane.xlu0 %1632
    %v1634 = vmax.f32 %v1612, %v1588
    %v1635 = vmax.f32 %v1615, %v1591
    %v1636 = vmax.f32 %v1618, %v1594
    %v1637 = vmax.f32 %v1621, %v1597
    %v1638 = vmax.f32 %v1624, %v1600
    %v1639 = vmax.f32 %v1627, %v1603
    %v1640 = vmax.f32 %v1630, %v1606
    %v1641 = vmax.f32 %v1633, %v1609
    %v1642 = vsub.f32 %v1540, %v1634
    %v1643 = vsub.f32 %v1545, %v1635
    %v1644 = vsub.f32 %v1550, %v1636
    %v1645 = vsub.f32 %v1555, %v1637
    %v1646 = vsub.f32 %v1560, %v1638
    %v1647 = vsub.f32 %v1565, %v1639
    %v1648 = vsub.f32 %v1570, %v1640
    %v1649 = vsub.f32 %v1575, %v1641
    %v1650 = vmul.f32 %v1642, 1.442695
    %v1651 = vpow.pop %v1650
    %v1652 = vmul.f32 %v1643, 1.442695
    %v1653 = vpow.pop %v1652
    %v1654 = vmul.f32 %v1644, 1.442695
    %v1655 = vpow.pop %v1654
    %v1656 = vmul.f32 %v1645, 1.442695
    %v1657 = vpow.pop %v1656
    %v1658 = vmul.f32 %v1646, 1.442695
    %v1659 = vpow.pop %v1658
    %v1660 = vmul.f32 %v1647, 1.442695
    %v1661 = vpow.pop %v1660
    %v1662 = vmul.f32 %v1648, 1.442695
    %v1663 = vpow.pop %v1662
    %v1664 = vmul.f32 %v1649, 1.442695
    %v1665 = vpow.pop %v1664
    %v1666 = vsub.f32 %v1588, %v1634
    %v1667 = vsub.f32 %v1591, %v1635
    %v1668 = vsub.f32 %v1594, %v1636
    %v1669 = vsub.f32 %v1597, %v1637
    %v1670 = vsub.f32 %v1600, %v1638
    %v1671 = vsub.f32 %v1603, %v1639
    %v1672 = vsub.f32 %v1606, %v1640
    %v1673 = vsub.f32 %v1609, %v1641
    %v1674 = vmul.f32 %v1666, 1.442695
    %v1675 = vpow.pop %v1674
    %v1676 = vmul.f32 %v1667, 1.442695
    %v1677 = vpow.pop %v1676
    %v1678 = vmul.f32 %v1668, 1.442695
    %v1679 = vpow.pop %v1678
    %v1680 = vmul.f32 %v1669, 1.442695
    %v1681 = vpow.pop %v1680
    %v1682 = vmul.f32 %v1670, 1.442695
    %v1683 = vpow.pop %v1682
    %v1684 = vmul.f32 %v1671, 1.442695
    %v1685 = vpow.pop %v1684
    %v1686 = vmul.f32 %v1672, 1.442695
    %v1687 = vpow.pop %v1686
    %v1688 = vmul.f32 %v1673, 1.442695
    %v1689 = vpow.pop %v1688
    %v1690 = vsel %vm1171, %v1651, 0.0
    %1691 = vadd.xlane.f32.xlu0 %v1690
    %v1692 = vpop.xlane.xlu0 %1691
    %v1693 = vsel %vm1171, %v1653, 0.0
    %1694 = vadd.xlane.f32.xlu0 %v1693
    %v1695 = vpop.xlane.xlu0 %1694
    %v1696 = vsel %vm1171, %v1655, 0.0
    %1697 = vadd.xlane.f32.xlu0 %v1696
    %v1698 = vpop.xlane.xlu0 %1697
    %v1699 = vsel %vm1171, %v1657, 0.0
    %1700 = vadd.xlane.f32.xlu0 %v1699
    %v1701 = vpop.xlane.xlu0 %1700
    %v1702 = vsel %vm1171, %v1659, 0.0
    %1703 = vadd.xlane.f32.xlu0 %v1702
    %v1704 = vpop.xlane.xlu0 %1703
    %v1705 = vsel %vm1171, %v1661, 0.0
    %1706 = vadd.xlane.f32.xlu0 %v1705
    %v1707 = vpop.xlane.xlu0 %1706
    %v1708 = vsel %vm1171, %v1663, 0.0
    %1709 = vadd.xlane.f32.xlu0 %v1708
    %v1710 = vpop.xlane.xlu0 %1709
    %v1711 = vsel %vm1171, %v1665, 0.0
    %1712 = vadd.xlane.f32.xlu0 %v1711
    %v1713 = vpop.xlane.xlu0 %1712
    %v1714 = vadd.f32 %v1692, %v1675
    %v1715 = vadd.f32 %v1695, %v1677
    %v1716 = vadd.f32 %v1698, %v1679
    %v1717 = vadd.f32 %v1701, %v1681
    %v1718 = vadd.f32 %v1704, %v1683
    %v1719 = vadd.f32 %v1707, %v1685
    %v1720 = vadd.f32 %v1710, %v1687
    %v1721 = vadd.f32 %v1713, %v1689
    %v1722 = vrcp.pop %v1714
    %v1723 = vrcp.pop %v1715
    %v1724 = vrcp.pop %v1716
    %v1725 = vrcp.pop %v1717
    %v1726 = vrcp.pop %v1718
    %v1727 = vrcp.pop %v1719
    %v1728 = vrcp.pop %v1720
    %v1729 = vrcp.pop %v1721
    %v1730 = vmul.f32 %v1675, %v1296
    %v1731 = vmul.f32 %v1677, %v1296
    %v1732 = vmul.f32 %v1679, %v1296
    %v1733 = vmul.f32 %v1681, %v1296
    %v1734 = vmul.f32 %v1683, %v1296
    %v1735 = vmul.f32 %v1685, %v1296
    %v1736 = vmul.f32 %v1687, %v1296
    %v1737 = vmul.f32 %v1689, %v1296
    %v1739 = vsel %vm1171, %v1651, 0
    %v1742 = vsel %vm1171, %v1653, 0
    %v1745 = vsel %vm1171, %v1655, 0
    %v1748 = vsel %vm1171, %v1657, 0
    %v1751 = vsel %vm1171, %v1659, 0
    %v1754 = vsel %vm1171, %v1661, 0
    %v1757 = vsel %vm1171, %v1663, 0
    %v1760 = vsel %vm1171, %v1665, 0
    %1762 = vmatprep.subr.mxu0 0.0
    %1763 = vmatpush1.msra.mxu0 %v366
    %1764 = vmatprep.subr.mxu0 0.0
    %1765 = vmatpush1.msra.mxu0 %v371
    %1766 = vmatprep.subr.mxu0 0.0
    %1767 = vmatpush1.msra.mxu0 0.0
    %1768 = vmatprep.subr.mxu0 0.0
    %1769 = vmatpush1.msra.mxu0 0.0
    %1770 = vmatprep.subr.mxu0 0.0
    %1771 = vmatpush1.msra.mxu0 0.0
    %1772 = vmatprep.subr.mxu0 0.0
    %1773 = vmatpush1.msra.mxu0 0.0
    %1774 = vmatprep.subr.mxu0 0.0
    %1775 = vmatpush1.msra.mxu0 0.0
    %1776 = vmatprep.subr.mxu0 0.0
    %1777 = vmatpush1.msra.mxu0 0.0
    %1778 = vmatprep.subr.mxu0 0.0
    %1779 = vmatpush1.msra.mxu0 0.0
    %1780 = vmatprep.subr.mxu0 0.0
    %1781 = vmatpush1.msra.mxu0 0.0
    %1782 = vmatprep.subr.mxu0 0.0
    %1783 = vmatpush1.msra.mxu0 0.0
    %1784 = vmatprep.subr.mxu0 0.0
    %1785 = vmatpush1.msra.mxu0 0.0
    %1786 = vmatprep.subr.mxu0 0.0
    %1787 = vmatpush1.msra.mxu0 0.0
    %1788 = vmatprep.subr.mxu0 0.0
    %1789 = vmatpush1.msra.mxu0 0.0
    %1790 = vmatprep.subr.mxu0 0.0
    %1791 = vmatpush1.msra.mxu0 0.0
    %1792 = vmatprep.subr.mxu0 0.0
    %1793 = vmatpush1.msra.mxu0 0.0
    %1794 = vmatprep.subr.mxu0 0.0
    %1795 = vmatpush1.msra.mxu0 0.0
    %1796 = vmatprep.subr.mxu0 0.0
    %1797 = vmatpush1.msra.mxu0 0.0
    %1798 = vmatprep.subr.mxu0 0.0
    %1799 = vmatpush1.msra.mxu0 0.0
    %1800 = vmatprep.subr.mxu0 0.0
    %1801 = vmatpush1.msra.mxu0 0.0
    %1802 = vmatprep.subr.mxu0 0.0
    %1803 = vmatpush1.msra.mxu0 0.0
    %1804 = vmatprep.subr.mxu0 0.0
    %1805 = vmatpush1.msra.mxu0 0.0
    %1806 = vmatprep.subr.mxu0 0.0
    %1807 = vmatpush1.msra.mxu0 0.0
    %1808 = vmatprep.subr.mxu0 0.0
    %1809 = vmatpush1.msra.mxu0 0.0
    %1810 = vmatprep.subr.mxu0 0.0
    %1811 = vmatpush1.msra.mxu0 0.0
    %1812 = vmatprep.subr.mxu0 0.0
    %1813 = vmatpush1.msra.mxu0 0.0
    %1814 = vmatprep.subr.mxu0 0.0
    %1815 = vmatpush1.msra.mxu0 0.0
    %1816 = vmatprep.subr.mxu0 0.0
    %1817 = vmatpush1.msra.mxu0 0.0
    %1818 = vmatprep.subr.mxu0 0.0
    %1819 = vmatpush1.msra.mxu0 0.0
    %1820 = vmatprep.subr.mxu0 0.0
    %1821 = vmatpush1.msra.mxu0 0.0
    %1822 = vmatprep.subr.mxu0 0.0
    %1823 = vmatpush1.msra.mxu0 0.0
    %1824 = vmatprep.subr.mxu0 0.0
    %1825 = vmatpush1.msra.mxu0 0.0
    %1826 = vmatprep.mubr.f32.mxu0 0.0
    %1827 = vmatmul.mubr.f32.gmra.mrb[0].mxu0 %v1739
    %v1828 = vpop.f32.mrb[0].mxu0
    %v1829 = vadd.f32 %v1730, %v1828
    %v1830 = vpop.f32.mrb[0].mxu0
    %1831 = vmatprep.mubr.f32.mxu0 0.0
    %1832 = vmatmul.mubr.f32.gmra.mrb[0].mxu0 %v1742
    %v1833 = vpop.f32.mrb[0].mxu0
    %v1834 = vadd.f32 %v1731, %v1833
    %v1835 = vpop.f32.mrb[0].mxu0
    %1836 = vmatprep.mubr.f32.mxu0 0.0
    %1837 = vmatmul.mubr.f32.gmra.mrb[0].mxu0 %v1745
    %v1838 = vpop.f32.mrb[0].mxu0
    %v1839 = vadd.f32 %v1732, %v1838
    %v1840 = vpop.f32.mrb[0].mxu0
    %1841 = vmatprep.mubr.f32.mxu0 0.0
    %1842 = vmatmul.mubr.f32.gmra.mrb[0].mxu0 %v1748
    %v1843 = vpop.f32.mrb[0].mxu0
    %v1844 = vadd.f32 %v1733, %v1843
    %v1845 = vpop.f32.mrb[0].mxu0
    %1846 = vmatprep.mubr.f32.mxu0 0.0
    %1847 = vmatmul.mubr.f32.gmra.mrb[0].mxu0 %v1751
    %v1848 = vpop.f32.mrb[0].mxu0
    %v1849 = vadd.f32 %v1734, %v1848
    %v1850 = vpop.f32.mrb[0].mxu0
    %1851 = vmatprep.mubr.f32.mxu0 0.0
    %1852 = vmatmul.mubr.f32.gmra.mrb[0].mxu0 %v1754
    %v1853 = vpop.f32.mrb[0].mxu0
    %v1854 = vadd.f32 %v1735, %v1853
    %v1855 = vpop.f32.mrb[0].mxu0
    %1856 = vmatprep.mubr.f32.mxu0 0.0
    %1857 = vmatmul.mubr.f32.gmra.mrb[0].mxu0 %v1757
    %v1858 = vpop.f32.mrb[0].mxu0
    %v1859 = vadd.f32 %v1736, %v1858
    %v1860 = vpop.f32.mrb[0].mxu0
    %1861 = vmatprep.mubr.f32.mxu0 0.0
    %1862 = vmatmul.mubr.f32.gmra.mrb[0].mxu0 %v1760
    %v1863 = vpop.f32.mrb[0].mxu0
    %v1864 = vadd.f32 %v1737, %v1863
    %v1865 = vpop.f32.mrb[0].mxu0
    %1866 = vdwg.mxu0
    %v1867 = vmul.f32 %v1829, %v1722
    %v1868 = vmul.f32 %v1834, %v1723
    %v1869 = vmul.f32 %v1839, %v1724
    %v1870 = vmul.f32 %v1844, %v1725
    %v1871 = vmul.f32 %v1849, %v1726
    %v1872 = vmul.f32 %v1854, %v1727
    %v1873 = vmul.f32 %v1859, %v1728
    %v1874 = vmul.f32 %v1864, %v1729
    %v1875 = vld [vmem:[%s9] sm:$0xff]
    %v1876 = vld [vmem:[%s9 + $0x8] sm:$0xff]
    %v1877 = vld [vmem:[%s9 + $0x10] sm:$0xff]
    %v1878 = vld [vmem:[%s9 + $0x18] sm:$0xff]
    %s1879 = scalar_lea.vmem %s9, 32
    %v1880 = vld [vmem:[%s1879] sm:$0xff]
    %v1881 = vld [vmem:[%s1879 + $0x8] sm:$0xff]
    %v1882 = vld [vmem:[%s1879 + $0x10] sm:$0xff]
    %v1883 = vld [vmem:[%s1879 + $0x18] sm:$0xff]
    %v1885 = vsel %vm218, %v1437, 0
    %v1888 = vsel %vm218, %v1438, 0
    %v1891 = vsel %vm218, %v1869, 0
    %v1894 = vsel %vm218, %v1870, 0
    %1896 = vmatprep.subr.mxu0 0.0
    %1897 = vmatpush1.msra.mxu0 %v1880
    %1898 = vmatprep.subr.mxu0 0.0
    %1899 = vmatpush1.msra.mxu0 %v1881
    %1900 = vmatprep.subr.mxu0 0.0
    %1901 = vmatpush1.msra.mxu0 %v1882
    %1902 = vmatprep.subr.mxu0 0.0
    %1903 = vmatpush1.msra.mxu0 %v1883
    %1904 = vmatprep.subr.mxu0 0.0
    %1905 = vmatpush1.msra.mxu0 0.0
    %1906 = vmatprep.subr.mxu0 0.0
    %1907 = vmatpush1.msra.mxu0 0.0
    %1908 = vmatprep.subr.mxu0 0.0
    %1909 = vmatpush1.msra.mxu0 0.0
    %1910 = vmatprep.subr.mxu0 0.0
    %1911 = vmatpush1.msra.mxu0 0.0
    %1912 = vmatprep.subr.mxu0 0.0
    %1913 = vmatpush1.msra.mxu0 0.0
    %1914 = vmatprep.subr.mxu0 0.0
    %1915 = vmatpush1.msra.mxu0 0.0
    %1916 = vmatprep.subr.mxu0 0.0
    %1917 = vmatpush1.msra.mxu0 0.0
    %1918 = vmatprep.subr.mxu0 0.0
    %1919 = vmatpush1.msra.mxu0 0.0
    %1920 = vmatprep.subr.mxu0 0.0
    %1921 = vmatpush1.msra.mxu0 0.0
    %1922 = vmatprep.subr.mxu0 0.0
    %1923 = vmatpush1.msra.mxu0 0.0
    %1924 = vmatprep.subr.mxu0 0.0
    %1925 = vmatpush1.msra.mxu0 0.0
    %1926 = vmatprep.subr.mxu0 0.0
    %1927 = vmatpush1.msra.mxu0 0.0
    %1928 = vmatprep.subr.mxu0 0.0
    %1929 = vmatpush1.msra.mxu0 0.0
    %1930 = vmatprep.subr.mxu0 0.0
    %1931 = vmatpush1.msra.mxu0 0.0
    %1932 = vmatprep.subr.mxu0 0.0
    %1933 = vmatpush1.msra.mxu0 0.0
    %1934 = vmatprep.subr.mxu0 0.0
    %1935 = vmatpush1.msra.mxu0 0.0
    %1936 = vmatprep.subr.mxu0 0.0
    %1937 = vmatpush1.msra.mxu0 0.0
    %1938 = vmatprep.subr.mxu0 0.0
    %1939 = vmatpush1.msra.mxu0 0.0
    %1940 = vmatprep.subr.mxu0 0.0
    %1941 = vmatpush1.msra.mxu0 0.0
    %1942 = vmatprep.subr.mxu0 0.0
    %1943 = vmatpush1.msra.mxu0 0.0
    %1944 = vmatprep.subr.mxu0 0.0
    %1945 = vmatpush1.msra.mxu0 0.0
    %1946 = vmatprep.subr.mxu0 0.0
    %1947 = vmatpush1.msra.mxu0 0.0
    %1948 = vmatprep.subr.mxu0 0.0
    %1949 = vmatpush1.msra.mxu0 0.0
    %1950 = vmatprep.subr.mxu0 0.0
    %1951 = vmatpush1.msra.mxu0 0.0
    %1952 = vmatprep.subr.mxu0 0.0
    %1953 = vmatpush1.msra.mxu0 0.0
    %1954 = vmatprep.subr.mxu0 0.0
    %1955 = vmatpush1.msra.mxu0 0.0
    %1956 = vmatprep.subr.mxu0 0.0
    %1957 = vmatpush1.msra.mxu0 0.0
    %1958 = vmatprep.subr.mxu0 0.0
    %1959 = vmatpush1.msra.mxu0 0.0
    %1960 = vmatprep.mubr.f32.mxu0 0.0
    %1961 = vmatmul.mubr.f32.gmra.mrb[0].mxu0 %v1885
    %v1962 = vpop.f32.mrb[0].mxu0
    %v1963 = vadd.f32 0.0, %v1962
    %v1964 = vpop.f32.mrb[0].mxu0
    %1965 = vmatprep.mubr.f32.mxu0 0.0
    %1966 = vmatmul.mubr.f32.gmra.mrb[0].mxu0 %v1888
    %v1967 = vpop.f32.mrb[0].mxu0
    %v1968 = vadd.f32 0.0, %v1967
    %v1969 = vpop.f32.mrb[0].mxu0
    %1970 = vmatprep.mubr.f32.mxu0 0.0
    %1971 = vmatmul.mubr.f32.gmra.mrb[0].mxu0 %v1891
    %v1972 = vpop.f32.mrb[0].mxu0
    %v1973 = vadd.f32 0.0, %v1972
    %v1974 = vpop.f32.mrb[0].mxu0
    %1975 = vmatprep.mubr.f32.mxu0 0.0
    %1976 = vmatmul.mubr.f32.gmra.mrb[0].mxu0 %v1894
    %v1977 = vpop.f32.mrb[0].mxu0
    %v1978 = vadd.f32 0.0, %v1977
    %v1979 = vpop.f32.mrb[0].mxu0
    %1980 = vdwg.mxu0
    %v1982 = vsel %vm218, %v1435, 0
    %v1985 = vsel %vm218, %v1436, 0
    %v1988 = vsel %vm218, %v1867, 0
    %v1991 = vsel %vm218, %v1868, 0
    %1993 = vmatprep.subr.mxu0 0.0
    %1994 = vmatpush1.msra.mxu0 %v1875
    %1995 = vmatprep.subr.mxu0 0.0
    %1996 = vmatpush1.msra.mxu0 %v1876
    %1997 = vmatprep.subr.mxu0 0.0
    %1998 = vmatpush1.msra.mxu0 %v1877
    %1999 = vmatprep.subr.mxu0 0.0
    %2000 = vmatpush1.msra.mxu0 %v1878
    %2001 = vmatprep.subr.mxu0 0.0
    %2002 = vmatpush1.msra.mxu0 0.0
    %2003 = vmatprep.subr.mxu0 0.0
    %2004 = vmatpush1.msra.mxu0 0.0
    %2005 = vmatprep.subr.mxu0 0.0
    %2006 = vmatpush1.msra.mxu0 0.0
    %2007 = vmatprep.subr.mxu0 0.0
    %2008 = vmatpush1.msra.mxu0 0.0
    %2009 = vmatprep.subr.mxu0 0.0
    %2010 = vmatpush1.msra.mxu0 0.0
    %2011 = vmatprep.subr.mxu0 0.0
    %2012 = vmatpush1.msra.mxu0 0.0
    %2013 = vmatprep.subr.mxu0 0.0
    %2014 = vmatpush1.msra.mxu0 0.0
    %2015 = vmatprep.subr.mxu0 0.0
    %2016 = vmatpush1.msra.mxu0 0.0
    %2017 = vmatprep.subr.mxu0 0.0
    %2018 = vmatpush1.msra.mxu0 0.0
    %2019 = vmatprep.subr.mxu0 0.0
    %2020 = vmatpush1.msra.mxu0 0.0
    %2021 = vmatprep.subr.mxu0 0.0
    %2022 = vmatpush1.msra.mxu0 0.0
    %2023 = vmatprep.subr.mxu0 0.0
    %2024 = vmatpush1.msra.mxu0 0.0
    %2025 = vmatprep.subr.mxu0 0.0
    %2026 = vmatpush1.msra.mxu0 0.0
    %2027 = vmatprep.subr.mxu0 0.0
    %2028 = vmatpush1.msra.mxu0 0.0
    %2029 = vmatprep.subr.mxu0 0.0
    %2030 = vmatpush1.msra.mxu0 0.0
    %2031 = vmatprep.subr.mxu0 0.0
    %2032 = vmatpush1.msra.mxu0 0.0
    %2033 = vmatprep.subr.mxu0 0.0
    %2034 = vmatpush1.msra.mxu0 0.0
    %2035 = vmatprep.subr.mxu0 0.0
    %2036 = vmatpush1.msra.mxu0 0.0
    %2037 = vmatprep.subr.mxu0 0.0
    %2038 = vmatpush1.msra.mxu0 0.0
    %2039 = vmatprep.subr.mxu0 0.0
    %2040 = vmatpush1.msra.mxu0 0.0
    %2041 = vmatprep.subr.mxu0 0.0
    %2042 = vmatpush1.msra.mxu0 0.0
    %2043 = vmatprep.subr.mxu0 0.0
    %2044 = vmatpush1.msra.mxu0 0.0
    %2045 = vmatprep.subr.mxu0 0.0
    %2046 = vmatpush1.msra.mxu0 0.0
    %2047 = vmatprep.subr.mxu0 0.0
    %2048 = vmatpush1.msra.mxu0 0.0
    %2049 = vmatprep.subr.mxu0 0.0
    %2050 = vmatpush1.msra.mxu0 0.0
    %2051 = vmatprep.subr.mxu0 0.0
    %2052 = vmatpush1.msra.mxu0 0.0
    %2053 = vmatprep.subr.mxu0 0.0
    %2054 = vmatpush1.msra.mxu0 0.0
    %2055 = vmatprep.subr.mxu0 0.0
    %2056 = vmatpush1.msra.mxu0 0.0
    %2057 = vmatprep.mubr.f32.mxu0 0.0
    %2058 = vmatmul.mubr.f32.gmra.mrb[0].mxu0 %v1982
    %v2059 = vpop.f32.mrb[0].mxu0
    %v2060 = vadd.f32 %v1963, %v2059
    %v2061 = vpop.f32.mrb[0].mxu0
    %2062 = vmatprep.mubr.f32.mxu0 0.0
    %2063 = vmatmul.mubr.f32.gmra.mrb[0].mxu0 %v1985
    %v2064 = vpop.f32.mrb[0].mxu0
    %v2065 = vadd.f32 %v1968, %v2064
    %v2066 = vpop.f32.mrb[0].mxu0
    %2067 = vmatprep.mubr.f32.mxu0 0.0
    %2068 = vmatmul.mubr.f32.gmra.mrb[0].mxu0 %v1988
    %v2069 = vpop.f32.mrb[0].mxu0
    %v2070 = vadd.f32 %v1973, %v2069
    %v2071 = vpop.f32.mrb[0].mxu0
    %2072 = vmatprep.mubr.f32.mxu0 0.0
    %2073 = vmatmul.mubr.f32.gmra.mrb[0].mxu0 %v1991
    %v2074 = vpop.f32.mrb[0].mxu0
    %v2075 = vadd.f32 %v1978, %v2074
    %v2076 = vpop.f32.mrb[0].mxu0
    %2077 = vdwg.mxu0
    %s2078 = scalar_lea.vmem %s9, 64
    %v2079 = vld [vmem:[%s2078] sm:$0xff]
    %v2080 = vld [vmem:[%s2078 + $0x8] sm:$0xff]
    %v2081 = vld [vmem:[%s2078 + $0x10] sm:$0xff]
    %v2082 = vld [vmem:[%s2078 + $0x18] sm:$0xff]
    %v2084 = vsel %vm218, %v1439, 0
    %v2087 = vsel %vm218, %v1440, 0
    %v2090 = vsel %vm218, %v1871, 0
    %v2093 = vsel %vm218, %v1872, 0
    %2095 = vmatprep.subr.mxu0 0.0
    %2096 = vmatpush1.msra.mxu0 %v2079
    %2097 = vmatprep.subr.mxu0 0.0
    %2098 = vmatpush1.msra.mxu0 %v2080
    %2099 = vmatprep.subr.mxu0 0.0
    %2100 = vmatpush1.msra.mxu0 %v2081
    %2101 = vmatprep.subr.mxu0 0.0
    %2102 = vmatpush1.msra.mxu0 %v2082
    %2103 = vmatprep.subr.mxu0 0.0
    %2104 = vmatpush1.msra.mxu0 0.0
    %2105 = vmatprep.subr.mxu0 0.0
    %2106 = vmatpush1.msra.mxu0 0.0
    %2107 = vmatprep.subr.mxu0 0.0
    %2108 = vmatpush1.msra.mxu0 0.0
    %2109 = vmatprep.subr.mxu0 0.0
    %2110 = vmatpush1.msra.mxu0 0.0
    %2111 = vmatprep.subr.mxu0 0.0
    %2112 = vmatpush1.msra.mxu0 0.0
    %2113 = vmatprep.subr.mxu0 0.0
    %2114 = vmatpush1.msra.mxu0 0.0
    %2115 = vmatprep.subr.mxu0 0.0
    %2116 = vmatpush1.msra.mxu0 0.0
    %2117 = vmatprep.subr.mxu0 0.0
    %2118 = vmatpush1.msra.mxu0 0.0
    %2119 = vmatprep.subr.mxu0 0.0
    %2120 = vmatpush1.msra.mxu0 0.0
    %2121 = vmatprep.subr.mxu0 0.0
    %2122 = vmatpush1.msra.mxu0 0.0
    %2123 = vmatprep.subr.mxu0 0.0
    %2124 = vmatpush1.msra.mxu0 0.0
    %2125 = vmatprep.subr.mxu0 0.0
    %2126 = vmatpush1.msra.mxu0 0.0
    %2127 = vmatprep.subr.mxu0 0.0
    %2128 = vmatpush1.msra.mxu0 0.0
    %2129 = vmatprep.subr.mxu0 0.0
    %2130 = vmatpush1.msra.mxu0 0.0
    %2131 = vmatprep.subr.mxu0 0.0
    %2132 = vmatpush1.msra.mxu0 0.0
    %2133 = vmatprep.subr.mxu0 0.0
    %2134 = vmatpush1.msra.mxu0 0.0
    %2135 = vmatprep.subr.mxu0 0.0
    %2136 = vmatpush1.msra.mxu0 0.0
    %2137 = vmatprep.subr.mxu0 0.0
    %2138 = vmatpush1.msra.mxu0 0.0
    %2139 = vmatprep.subr.mxu0 0.0
    %2140 = vmatpush1.msra.mxu0 0.0
    %2141 = vmatprep.subr.mxu0 0.0
    %2142 = vmatpush1.msra.mxu0 0.0
    %2143 = vmatprep.subr.mxu0 0.0
    %2144 = vmatpush1.msra.mxu0 0.0
    %2145 = vmatprep.subr.mxu0 0.0
    %2146 = vmatpush1.msra.mxu0 0.0
    %2147 = vmatprep.subr.mxu0 0.0
    %2148 = vmatpush1.msra.mxu0 0.0
    %2149 = vmatprep.subr.mxu0 0.0
    %2150 = vmatpush1.msra.mxu0 0.0
    %2151 = vmatprep.subr.mxu0 0.0
    %2152 = vmatpush1.msra.mxu0 0.0
    %2153 = vmatprep.subr.mxu0 0.0
    %2154 = vmatpush1.msra.mxu0 0.0
    %2155 = vmatprep.subr.mxu0 0.0
    %2156 = vmatpush1.msra.mxu0 0.0
    %2157 = vmatprep.subr.mxu0 0.0
    %2158 = vmatpush1.msra.mxu0 0.0
    %2159 = vmatprep.mubr.f32.mxu0 0.0
    %2160 = vmatmul.mubr.f32.gmra.mrb[0].mxu0 %v2084
    %v2161 = vpop.f32.mrb[0].mxu0
    %v2162 = vadd.f32 0.0, %v2161
    %v2163 = vpop.f32.mrb[0].mxu0
    %2164 = vmatprep.mubr.f32.mxu0 0.0
    %2165 = vmatmul.mubr.f32.gmra.mrb[0].mxu0 %v2087
    %v2166 = vpop.f32.mrb[0].mxu0
    %v2167 = vadd.f32 0.0, %v2166
    %v2168 = vpop.f32.mrb[0].mxu0
    %2169 = vmatprep.mubr.f32.mxu0 0.0
    %2170 = vmatmul.mubr.f32.gmra.mrb[0].mxu0 %v2090
    %v2171 = vpop.f32.mrb[0].mxu0
    %v2172 = vadd.f32 0.0, %v2171
    %v2173 = vpop.f32.mrb[0].mxu0
    %2174 = vmatprep.mubr.f32.mxu0 0.0
    %2175 = vmatmul.mubr.f32.gmra.mrb[0].mxu0 %v2093
    %v2176 = vpop.f32.mrb[0].mxu0
    %v2177 = vadd.f32 0.0, %v2176
    %v2178 = vpop.f32.mrb[0].mxu0
    %2179 = vdwg.mxu0
    %v2180 = vadd.f32 %v2060, %v2162
    %v2181 = vadd.f32 %v2065, %v2167
    %v2182 = vadd.f32 %v2070, %v2172
    %v2183 = vadd.f32 %v2075, %v2177
    %s2184 = scalar_lea.vmem %s9, 96
    %v2185 = vld [vmem:[%s2184] sm:$0xff]
    %v2186 = vld [vmem:[%s2184 + $0x8] sm:$0xff]
    %v2187 = vld [vmem:[%s2184 + $0x10] sm:$0xff]
    %v2188 = vld [vmem:[%s2184 + $0x18] sm:$0xff]
    %v2190 = vsel %vm218, %v1441, 0
    %v2193 = vsel %vm218, %v1442, 0
    %v2196 = vsel %vm218, %v1873, 0
    %v2199 = vsel %vm218, %v1874, 0
    %2201 = vmatprep.subr.mxu0 0.0
    %2202 = vmatpush1.msra.mxu0 %v2185
    %2203 = vmatprep.subr.mxu0 0.0
    %2204 = vmatpush1.msra.mxu0 %v2186
    %2205 = vmatprep.subr.mxu0 0.0
    %2206 = vmatpush1.msra.mxu0 %v2187
    %2207 = vmatprep.subr.mxu0 0.0
    %2208 = vmatpush1.msra.mxu0 %v2188
    %2209 = vmatprep.subr.mxu0 0.0
    %2210 = vmatpush1.msra.mxu0 0.0
    %2211 = vmatprep.subr.mxu0 0.0
    %2212 = vmatpush1.msra.mxu0 0.0
    %2213 = vmatprep.subr.mxu0 0.0
    %2214 = vmatpush1.msra.mxu0 0.0
    %2215 = vmatprep.subr.mxu0 0.0
    %2216 = vmatpush1.msra.mxu0 0.0
    %2217 = vmatprep.subr.mxu0 0.0
    %2218 = vmatpush1.msra.mxu0 0.0
    %2219 = vmatprep.subr.mxu0 0.0
    %2220 = vmatpush1.msra.mxu0 0.0
    %2221 = vmatprep.subr.mxu0 0.0
    %2222 = vmatpush1.msra.mxu0 0.0
    %2223 = vmatprep.subr.mxu0 0.0
    %2224 = vmatpush1.msra.mxu0 0.0
    %2225 = vmatprep.subr.mxu0 0.0
    %2226 = vmatpush1.msra.mxu0 0.0
    %2227 = vmatprep.subr.mxu0 0.0
    %2228 = vmatpush1.msra.mxu0 0.0
    %2229 = vmatprep.subr.mxu0 0.0
    %2230 = vmatpush1.msra.mxu0 0.0
    %2231 = vmatprep.subr.mxu0 0.0
    %2232 = vmatpush1.msra.mxu0 0.0
    %2233 = vmatprep.subr.mxu0 0.0
    %2234 = vmatpush1.msra.mxu0 0.0
    %2235 = vmatprep.subr.mxu0 0.0
    %2236 = vmatpush1.msra.mxu0 0.0
    %2237 = vmatprep.subr.mxu0 0.0
    %2238 = vmatpush1.msra.mxu0 0.0
    %2239 = vmatprep.subr.mxu0 0.0
    %2240 = vmatpush1.msra.mxu0 0.0
    %2241 = vmatprep.subr.mxu0 0.0
    %2242 = vmatpush1.msra.mxu0 0.0
    %2243 = vmatprep.subr.mxu0 0.0
    %2244 = vmatpush1.msra.mxu0 0.0
    %2245 = vmatprep.subr.mxu0 0.0
    %2246 = vmatpush1.msra.mxu0 0.0
    %2247 = vmatprep.subr.mxu0 0.0
    %2248 = vmatpush1.msra.mxu0 0.0
    %2249 = vmatprep.subr.mxu0 0.0
    %2250 = vmatpush1.msra.mxu0 0.0
    %2251 = vmatprep.subr.mxu0 0.0
    %2252 = vmatpush1.msra.mxu0 0.0
    %2253 = vmatprep.subr.mxu0 0.0
    %2254 = vmatpush1.msra.mxu0 0.0
    %2255 = vmatprep.subr.mxu0 0.0
    %2256 = vmatpush1.msra.mxu0 0.0
    %2257 = vmatprep.subr.mxu0 0.0
    %2258 = vmatpush1.msra.mxu0 0.0
    %2259 = vmatprep.subr.mxu0 0.0
    %2260 = vmatpush1.msra.mxu0 0.0
    %2261 = vmatprep.subr.mxu0 0.0
    %2262 = vmatpush1.msra.mxu0 0.0
    %2263 = vmatprep.subr.mxu0 0.0
    %2264 = vmatpush1.msra.mxu0 0.0
    %2265 = vmatprep.mubr.f32.mxu0 0.0
    %2266 = vmatmul.mubr.f32.gmra.mrb[0].mxu0 %v2190
    %v2267 = vpop.f32.mrb[0].mxu0
    %v2268 = vadd.f32 0.0, %v2267
    %v2269 = vpop.f32.mrb[0].mxu0
    %2270 = vmatprep.mubr.f32.mxu0 0.0
    %2271 = vmatmul.mubr.f32.gmra.mrb[0].mxu0 %v2193
    %v2272 = vpop.f32.mrb[0].mxu0
    %v2273 = vadd.f32 0.0, %v2272
    %v2274 = vpop.f32.mrb[0].mxu0
    %2275 = vmatprep.mubr.f32.mxu0 0.0
    %2276 = vmatmul.mubr.f32.gmra.mrb[0].mxu0 %v2196
    %v2277 = vpop.f32.mrb[0].mxu0
    %v2278 = vadd.f32 0.0, %v2277
    %v2279 = vpop.f32.mrb[0].mxu0
    %2280 = vmatprep.mubr.f32.mxu0 0.0
    %2281 = vmatmul.mubr.f32.gmra.mrb[0].mxu0 %v2199
    %v2282 = vpop.f32.mrb[0].mxu0
    %v2283 = vadd.f32 0.0, %v2282
    %v2284 = vpop.f32.mrb[0].mxu0
    %2285 = vdwg.mxu0
    %v2286 = vadd.f32 %v2180, %v2268
    %v2287 = vadd.f32 %v2181, %v2273
    %v2288 = vadd.f32 %v2182, %v2278
    %v2289 = vadd.f32 %v2183, %v2283
    %v2290 = vsel %vm43, %v2286, 0.0
    %2291 = vadd.xlane.f32.xlu0 %v2290
    %v2292 = vpop.xlane.xlu0 %2291
    %v2293 = vsel %vm43, %v2287, 0.0
    %2294 = vadd.xlane.f32.xlu0 %v2293
    %v2295 = vpop.xlane.xlu0 %2294
    %v2296 = vsel %vm43, %v2288, 0.0
    %2297 = vadd.xlane.f32.xlu0 %v2296
    %v2298 = vpop.xlane.xlu0 %2297
    %v2299 = vsel %vm43, %v2289, 0.0
    %2300 = vadd.xlane.f32.xlu0 %v2299
    %v2301 = vpop.xlane.xlu0 %2300
    %v2302 = vmul.f32 %v2292, %v56
    %v2303 = vmul.f32 %v2295, %v56
    %v2304 = vmul.f32 %v2298, %v56
    %v2305 = vmul.f32 %v2301, %v56
    %v2306 = vsub.f32 %v2286, %v2302
    %v2307 = vsub.f32 %v2287, %v2303
    %v2308 = vsub.f32 %v2288, %v2304
    %v2309 = vsub.f32 %v2289, %v2305
    %v2310 = vmul.f32 %v2306, %v2306
    %v2311 = vmul.f32 %v2307, %v2307
    %v2312 = vmul.f32 %v2308, %v2308
    %v2313 = vmul.f32 %v2309, %v2309
    %v2314 = vsel %vm43, %v2310, 0.0
    %2315 = vadd.xlane.f32.xlu0 %v2314
    %v2316 = vpop.xlane.xlu0 %2315
    %v2317 = vsel %vm43, %v2311, 0.0
    %2318 = vadd.xlane.f32.xlu0 %v2317
    %v2319 = vpop.xlane.xlu0 %2318
    %v2320 = vsel %vm43, %v2312, 0.0
    %2321 = vadd.xlane.f32.xlu0 %v2320
    %v2322 = vpop.xlane.xlu0 %2321
    %v2323 = vsel %vm43, %v2313, 0.0
    %2324 = vadd.xlane.f32.xlu0 %v2323
    %v2325 = vpop.xlane.xlu0 %2324
    %v2326 = vmul.f32 %v2316, %v56
    %v2327 = vmul.f32 %v2319, %v56
    %v2328 = vmul.f32 %v2322, %v56
    %v2329 = vmul.f32 %v2325, %v56
    %v2330 = vadd.f32 %v2326, 1e-05
    %v2331 = vadd.f32 %v2327, 1e-05
    %v2332 = vadd.f32 %v2328, 1e-05
    %v2333 = vadd.f32 %v2329, 1e-05
    %v2334 = vrsqrt.pop %v2330
    %v2335 = vrsqrt.pop %v2331
    %v2336 = vrsqrt.pop %v2332
    %v2337 = vrsqrt.pop %v2333
    %v2338 = vmul.f32 %v2306, %v2334
    %v2339 = vmul.f32 %v2307, %v2335
    %v2340 = vmul.f32 %v2308, %v2336
    %v2341 = vmul.f32 %v2309, %v2337
    %v2342 = vld [vmem:[%s10] sm:$0x1]
    %v2344 = vlaneseq
    %v2345 = vshrl.u32 %v2344, 7
    %v2346 = vsub.s32 0, %v2345
    %v2347 = vrot.slane %v2342, %v2346
    %v2349 = vmul.f32 %v2338, %v2347
    %v2350 = vmul.f32 %v2339, %v2347
    %v2351 = vmul.f32 %v2340, %v2347
    %v2352 = vmul.f32 %v2341, %v2347
    %2353 = vst.msk [vmem:[#allocation2] sm:$0xff] %vm43, %v2349
    %2354 = vst.msk [vmem:[#allocation2 + $0x8] sm:$0xff] %vm43, %v2350
    %2355 = vst.msk [vmem:[#allocation2 + $0x10] sm:$0xff] %vm43, %v2351
    %2356 = vst.msk [vmem:[#allocation2 + $0x18] sm:$0xff] %vm43, %v2352
    // Predicated region
    $region46: #{tpu_custom_call.1} parent=1 // pred_check
      _
    $region47: #{tpu_custom_call.1} parent=1 // pred_check_branch
      %2358 = sbr.rel (0) target = $region49
    $region48: #{tpu_custom_call.1} parent=1 // pred_region
      %s2360 = ssub.s32 512, 512
      %2361 = vsyncadd [#allocation3], %s2360
      %s2362 = sshll.u32 [#allocation2], 4
      %s2363 = int_to_ptr.vmem [resolvable:$true] %s2362
      %2368 = dma.vmem_to_hbm [thread:$0]  %s2363, 512, %s11, [#allocation3], 128, 128, 8
    $region49: #{tpu_custom_call.1} parent=1 // pred_fallthru
      _
    // Predicated region
    $region50: #{tpu_custom_call.1} parent=1 // pred_check
      _
    $region51: #{tpu_custom_call.1} parent=1 // pred_check_branch
      %2370 = sbr.rel (0) target = $region53
    $region52: #{tpu_custom_call.1} parent=1 // pred_region
      %2371 = dma.done [#allocation3], 512
    $region53: #{tpu_custom_call.1} parent=1 // pred_fallthru
      _
    %2372 = vsyncpa [#allocation3], 1

</llo_original>
